<compile_context>
chip_gen: v6e
topology: v6e:2x2x1
jax: 0.10.0
libtpu: 0.0.40
codegen_flags: <defaults>
</compile_context>

<pallas_src>
import functools

import jax
import jax.numpy as jnp
from jax.experimental import pallas as pl
from jax.experimental.pallas import tpu as pltpu


_VMEM_LIMIT_BYTES = 32 * 1024 * 1024   # above v5e's 16 MiB default, <= all gens


# ----------------------------------------------------------------------------
# In-kernel window regroup helpers (VMEM-local; trivial when num_win_w == 1)
# ----------------------------------------------------------------------------
def _rows_to_window_tokens(x, ws, num_win_w):
    """(R, C) NHWC-row-major rows -> rows regrouped so every consecutive run of
    ws*ws rows is one attention window.  Minor (channel) dim is preserved."""
    R, C = x.shape
    rb = R // (ws * num_win_w * ws)
    x = x.reshape(rb, ws, num_win_w, ws, C)
    if num_win_w > 1:                         # trace-time branch
        x = jnp.transpose(x, (0, 2, 1, 3, 4))
    return x.reshape(R, C)


def _window_tokens_to_rows(x, ws, num_win_w):
    R, C = x.shape
    rb = R // (ws * num_win_w * ws)
    x = x.reshape(rb, num_win_w, ws, ws, C)
    if num_win_w > 1:
        x = jnp.transpose(x, (0, 2, 1, 3, 4))
    return x.reshape(R, C)


# ----------------------------------------------------------------------------
# Pallas kernels
# ----------------------------------------------------------------------------
def _matmul_bias_kernel(x_ref, w_ref, b_ref, o_ref):
    """o = x @ w + b   (patch-embedding / downsample conv as matmul)."""
    acc = jnp.dot(x_ref[...], w_ref[...], preferred_element_type=jnp.float32)
    o_ref[...] = (acc + b_ref[...]).astype(o_ref.dtype)


def _attn_layer_kernel(x_ref,
                       ln1_g, ln1_b, wqkv, bqkv, wo, bo,
                       ln2_g, ln2_b, w1, b1, w2, b2,
                       o_ref, *, num_heads, ws, num_win_w):
    """One fused LocalAttnLayer on a block of NHWC rows (whole rows-of-windows)."""
    eps = 1e-5
    x = _rows_to_window_tokens(x_ref[...].astype(jnp.float32), ws, num_win_w)
    M, C = x.shape                              # M = (#windows in block) * T
    T = ws * ws
    nwb = M // T
    hd = C // num_heads

    # ---- LayerNorm 1 (f32) ----
    mu = jnp.mean(x, axis=-1, keepdims=True)
    var = jnp.mean((x - mu) ** 2, axis=-1, keepdims=True)
    xn = (x - mu) * jax.lax.rsqrt(var + eps) * ln1_g[...] + ln1_b[...]

    # ---- QKV projection: one (M, C) @ (C, 3C) bf16 matmul.  The 1/sqrt(hd)
    #      scale is pre-folded into the Q columns of wqkv / bqkv. ----
    qkv = jnp.dot(xn.astype(jnp.bfloat16), wqkv[...],
                  preferred_element_type=jnp.float32) + bqkv[...]

    # ---- windowed multi-head attention (window-batched einsums per head) ----
    heads = []
    for h in range(num_heads):                  # static, small unroll
        qh = qkv[:, h * hd:(h + 1) * hd].reshape(nwb, T, hd).astype(jnp.bfloat16)
        kh = qkv[:, C + h * hd:C + (h + 1) * hd].reshape(nwb, T, hd).astype(jnp.bfloat16)
        vh = qkv[:, 2 * C + h * hd:2 * C + (h + 1) * hd].reshape(nwb, T, hd).astype(jnp.bfloat16)
        s = jnp.einsum("wqd,wkd->wqk", qh, kh,
                       preferred_element_type=jnp.float32)           # (nwb, T, T)
        s = s - jnp.max(s, axis=-1, keepdims=True)
        p = jnp.exp(s)                                                # <= 1, bf16-safe
        denom = jnp.sum(p, axis=-1, keepdims=True)                    # (nwb, T, 1)
        oh = jnp.einsum("wqk,wkd->wqd", p.astype(jnp.bfloat16), vh,
                        preferred_element_type=jnp.float32)           # (nwb, T, hd)
        # Deferred softmax normalization: scale the (T, hd) output, not (T, T) p.
        oh = oh * pl.reciprocal(denom, approx=True)
        heads.append(oh.reshape(M, hd))
    attn = jnp.concatenate(heads, axis=-1)                            # (M, C)

    # ---- output projection: single (M, C) @ (C, C) matmul (K = C, not hd) ----
    proj = jnp.dot(attn.astype(jnp.bfloat16), wo[...],
                   preferred_element_type=jnp.float32) + bo[...]
    x = x + proj                                                      # residual 1

    # ---- LayerNorm 2 (f32) ----
    mu2 = jnp.mean(x, axis=-1, keepdims=True)
    var2 = jnp.mean((x - mu2) ** 2, axis=-1, keepdims=True)
    xn2 = (x - mu2) * jax.lax.rsqrt(var2 + eps) * ln2_g[...] + ln2_b[...]

    # ---- MLP (bf16 matmuls, f32 accumulate) ----
    # TODO(synk): PyTorch nn.GELU defaults to exact erf; tanh approx used here.
    hdn = jnp.dot(xn2.astype(jnp.bfloat16), w1[...],
                  preferred_element_type=jnp.float32) + b1[...]
    hdn = jax.nn.gelu(hdn, approximate=True)
    y = jnp.dot(hdn.astype(jnp.bfloat16), w2[...],
                preferred_element_type=jnp.float32) + b2[...]
    y = x + y                                                         # residual 2

    o_ref[...] = _window_tokens_to_rows(y, ws, num_win_w).astype(o_ref.dtype)


# ----------------------------------------------------------------------------
# Tiling heuristics (prefer even step counts >= 2 for v7x's 2 TensorCores)
# ----------------------------------------------------------------------------
def _pick_tile_m(M, target=256):
    if M <= 16:
        return M
    hi = min(target, (M // 8) * 8)
    cands = list(range(hi, 7, -8))
    for tm in cands:                          # exact divisor, even step count
        if M % tm == 0 and (M // tm) % 2 == 0:
            return tm
    for tm in cands:                          # exact divisor, >=2 steps
        if M % tm == 0 and M // tm >= 2:
            return tm
    for tm in cands:                          # padded, even step count
        if pl.cdiv(M, tm) % 2 == 0:
            return tm
    return cands[0] if cands else M


def _pick_wrow_block(n_wrows, rows_per_wrow, target_rows=512):
    """#rows-of-windows per grid step; biggest block <= target with even grid."""
    cap = max(1, target_rows // rows_per_wrow)
    divs = [d for d in range(1, n_wrows + 1) if n_wrows % d == 0]
    good = [d for d in divs if d <= cap and (n_wrows // d) % 2 == 0]
    if good:
        return max(good)
    ok = [d for d in divs if d <= cap and n_wrows // d >= 2]
    if ok:
        return max(ok)
    small = [d for d in divs if d <= cap]
    return max(small) if small else 1


# ----------------------------------------------------------------------------
# Wrappers
# ----------------------------------------------------------------------------
def downsample_apply(x_nchw, w, b, dt):
    """Strided patch-embed conv as a row-tiled Pallas matmul.  Returns NHWC.

    TODO(synk): patch extraction (transpose + reshape) is still one XLA copy
                pass over the input; folding it into the BlockSpec would need
                sub-(8,128) blocks on the NCHW input.
    """
    B, Cin, H, W = x_nchw.shape
    Ho, Wo = H // dt, W // dt
    x = jnp.transpose(x_nchw, (0, 2, 3, 1))                         # NHWC
    x = x.reshape(B, Ho, dt, Wo, dt, Cin).transpose(0, 1, 3, 2, 4, 5)
    patches = x.reshape(B * Ho * Wo, dt * dt * Cin).astype(jnp.bfloat16)
    M, K = patches.shape
    N = w.shape[1]

    tm = _pick_tile_m(M)
    grid_m = pl.cdiv(M, tm)
    Mp = grid_m * tm
    if Mp != M:
        patches = jnp.pad(patches, ((0, Mp - M), (0, 0)))

    out = pl.pallas_call(
        _matmul_bias_kernel,
        out_shape=jax.ShapeDtypeStruct((Mp, N), x_nchw.dtype),
        grid=(grid_m,),
        in_specs=[pl.BlockSpec((tm, K), lambda i: (i, 0)),
                  pl.BlockSpec((K, N), lambda i: (0, 0)),
                  pl.BlockSpec((1, N), lambda i: (0, 0))],
        out_specs=pl.BlockSpec((tm, N), lambda i: (i, 0)),
        compiler_params=pltpu.CompilerParams(
            dimension_semantics=("parallel",),
            vmem_limit_bytes=_VMEM_LIMIT_BYTES),
    )(patches, w.astype(jnp.bfloat16), b)
    return out[:M].reshape(B, Ho, Wo, N)                             # NHWC (views)


_PARAM_ORDER = ("ln1_g", "ln1_b", "wqkv", "bqkv", "wo", "bo",
                "ln2_g", "ln2_b", "w1", "b1", "w2", "b2")
# Matmul weights shipped to VMEM as bf16; LN/bias params stay f32.
_BF16_PARAMS = ("wqkv", "wo", "w1", "w2")


def attn_layer_apply(x_nhwc, p, ws, shift, num_heads):
    B, Hf, Wf, C = x_nhwc.shape
    assert Hf % ws == 0 and Wf % ws == 0 and C % num_heads == 0
    hd = C // num_heads
    scale = 1.0 / float(hd) ** 0.5

    # Param prep (tiny, O(C^2), XLA-side): fold the attention scale into the Q
    # columns of wqkv / bqkv once; pre-cast matmul weights to bf16.
    prm = dict(p)
    prm["wqkv"] = prm["wqkv"].at[:, :C].multiply(scale)
    prm["bqkv"] = prm["bqkv"].at[:, :C].multiply(scale)
    for name in _BF16_PARAMS:
        prm[name] = prm[name].astype(jnp.bfloat16)

    # Cyclic shift for odd layers (XLA roll; partition/reverse are in-kernel).
    x_s = jnp.roll(x_nhwc, (-shift, -shift), axis=(1, 2)) if shift > 0 else x_nhwc
    flat = x_s.reshape(B * Hf * Wf, C)        # pure view, no data movement

    num_win_w = Wf // ws
    rows_per_wrow = ws * Wf                   # matmul rows per row-of-windows
    n_wrows = (B * Hf) // ws
    rb = _pick_wrow_block(n_wrows, rows_per_wrow)
    block_rows = rb * rows_per_wrow
    if block_rows % 8 != 0 and block_rows != B * Hf * Wf:
        rb = n_wrows                          # fall back to a single full block
        block_rows = rb * rows_per_wrow
    grid = n_wrows // rb

    in_specs = [pl.BlockSpec((block_rows, C), lambda i: (i, 0))]
    # TODO(synk): on v7x, mark these constant-index weight specs
    #             pipeline_mode=pl.Buffered(1) to avoid double-buffering them.
    in_specs += [pl.BlockSpec(prm[name].shape, lambda i: (0, 0))
                 for name in _PARAM_ORDER]

    T = ws * ws
    nW = (B * Hf * Wf) // T
    ffn = p["w1"].shape[1]
    flops = 2 * nW * T * (3 * C * C + 2 * T * C + C * C + 2 * C * ffn)
    transcendentals = nW * (num_heads * T * T + T * ffn)
    param_bytes = sum(int(prm[n].size) * prm[n].dtype.itemsize
                      for n in _PARAM_ORDER)
    bytes_accessed = 2 * B * Hf * Wf * C * 4 + param_bytes

    out = pl.pallas_call(
        functools.partial(_attn_layer_kernel, num_heads=num_heads, ws=ws,
                          num_win_w=num_win_w),
        out_shape=jax.ShapeDtypeStruct((B * Hf * Wf, C), x_nhwc.dtype),
        grid=(grid,),
        in_specs=in_specs,
        out_specs=pl.BlockSpec((block_rows, C), lambda i: (i, 0)),
        compiler_params=pltpu.CompilerParams(
            dimension_semantics=("parallel",),
            vmem_limit_bytes=_VMEM_LIMIT_BYTES),
        cost_estimate=pl.CostEstimate(flops=int(flops),
                                      transcendentals=int(transcendentals),
                                      bytes_accessed=int(bytes_accessed)),
    )(flat, *[prm[name] for name in _PARAM_ORDER])

    y = out.reshape(B, Hf, Wf, C)             # pure view
    if shift > 0:
        y = jnp.roll(y, (shift, shift), axis=(1, 2))
    return y


def encoder_block_apply(x_nchw, params, *, down_times, patch_size, num_heads):
    if down_times > 1:
        feats = downsample_apply(x_nchw, params["embed_w"], params["embed_b"],
                                 down_times)                         # NHWC
    else:
        # Only valid when in_channels == inner_channels (matches the module).
        feats = jnp.transpose(x_nchw, (0, 2, 3, 1))
    for i, lp in enumerate(params["layers"]):
        shift = 0 if i % 2 == 0 else patch_size // 2
        feats = attn_layer_apply(feats, lp, patch_size, shift, num_heads)
    return jnp.transpose(feats, (0, 3, 1, 2))                        # back to NCHW


# ----------------------------------------------------------------------------
# Deterministic parameter initialization
# ----------------------------------------------------------------------------
def init_params(key, in_ch, C, dt, num_layers, ffn_dim):
    keys = jax.random.split(key, 1 + 5 * num_layers)
    params = {
        "embed_w": 0.02 * jax.random.normal(keys[0], (dt * dt * in_ch, C), jnp.float32),
        "embed_b": jnp.zeros((1, C), jnp.float32),
        "layers": [],
    }
    for i in range(num_layers):
        k = keys[1 + 5 * i: 1 + 5 * (i + 1)]
        lp = {
            "ln1_g": jnp.ones((1, C), jnp.float32),
            "ln1_b": jnp.zeros((1, C), jnp.float32),
            "wqkv": 0.02 * jax.random.normal(k[0], (C, 3 * C), jnp.float32),
            "bqkv": jnp.zeros((1, 3 * C), jnp.float32),
            "wo": 0.02 * jax.random.normal(k[1], (C, C), jnp.float32),
            "bo": jnp.zeros((1, C), jnp.float32),
            "ln2_g": jnp.ones((1, C), jnp.float32),
            "ln2_b": jnp.zeros((1, C), jnp.float32),
            "w1": 0.02 * jax.random.normal(k[2], (C, ffn_dim), jnp.float32),
            "b1": jnp.zeros((1, ffn_dim), jnp.float32),
            "w2": 0.02 * jax.random.normal(k[3], (ffn_dim, C), jnp.float32),
            "b2": jnp.zeros((1, C), jnp.float32),
        }
        params["layers"].append(lp)
    return params


# ----------------------------------------------------------------------------
# Main
# ----------------------------------------------------------------------------
if __name__ == "__main__":
    # Small config consistent with the module defaults.
    B, IN_CH, H, W = 2, 4, 16, 16
    INNER_CH = 24            # divisible by num_heads=3
    DOWN_TIMES = 4
    PATCH_SIZE = 4
    NUM_LAYERS = 2           # (module default is 12; small for demo)
    NUM_HEADS = 3
    FFN_DIM = 4 * INNER_CH

    key = jax.random.PRNGKey(0)
    k_x, k_p = jax.random.split(key)
    x = jax.random.normal(k_x, (B, IN_CH, H, W), jnp.float32)
    params = init_params(k_p, IN_CH, INNER_CH, DOWN_TIMES, NUM_LAYERS, FFN_DIM)

    fwd = jax.jit(functools.partial(encoder_block_apply,
                                    down_times=DOWN_TIMES,
                                    patch_size=PATCH_SIZE,
                                    num_heads=NUM_HEADS))
    out = fwd(x, params)
    out = jax.block_until_ready(out)

    expected = (B, INNER_CH, H // DOWN_TIMES, W // DOWN_TIMES)
    assert out.shape == expected, (out.shape, expected)
    assert bool(jnp.all(jnp.isfinite(out)))
    print("KERNEL_OK")
</pallas_src>

<mosaic_0001>
module attributes {stable_mosaic.version = 11 : i64} {
  func.func @_matmul_bias_kernel(%arg0: i32, %arg1: memref<16x64xbf16, #tpu.memory_space<vmem>>, %arg2: memref<64x24xbf16, #tpu.memory_space<vmem>>, %arg3: memref<1x24xf32, #tpu.memory_space<vmem>>, %arg4: memref<16x24xf32, #tpu.memory_space<vmem>>) attributes {dimension_semantics = [#tpu.dimension_semantics<parallel>], iteration_bounds = array<i64: 2>, scalar_prefetch = 0 : i64, scratch_operands = 0 : i64, tpu.core_type = #tpu.core_type<tc>, window_params = [{transform_indices = @transform_0, window_bounds = array<i64: 16, 64>}, {pipeline_mode = #tpu.pipeline_mode<synchronous>, transform_indices = @transform_1, window_bounds = array<i64: 64, 24>}, {pipeline_mode = #tpu.pipeline_mode<synchronous>, transform_indices = @transform_2, window_bounds = array<i64: 1, 24>}, {transform_indices = @transform_3, window_bounds = array<i64: 16, 24>}]} {
    %c0 = arith.constant 0 : index
    %c0_0 = arith.constant 0 : index
    %0 = vector.load %arg1[%c0, %c0_0] : memref<16x64xbf16, #tpu.memory_space<vmem>>, vector<16x64xbf16>
    %c0_1 = arith.constant 0 : index
    %c0_2 = arith.constant 0 : index
    %1 = vector.load %arg2[%c0_1, %c0_2] : memref<64x24xbf16, #tpu.memory_space<vmem>>, vector<64x24xbf16>
    %cst = arith.constant dense<0.000000e+00> : vector<16x24xf32>
    %2 = tpu.matmul %0, %1, %cst {dimension_numbers = #tpu.dot_dimension_numbers<[1], [0], [0], [1], [0, 0, 1, 1], [], []>} : vector<16x64xbf16>, vector<64x24xbf16>, vector<16x24xf32> -> vector<16x24xf32>
    %c0_3 = arith.constant 0 : index
    %c0_4 = arith.constant 0 : index
    %3 = vector.load %arg3[%c0_3, %c0_4] : memref<1x24xf32, #tpu.memory_space<vmem>>, vector<1x24xf32>
    %4 = vector.broadcast %3 : vector<1x24xf32> to vector<16x24xf32>
    %5 = arith.addf %2, %4 : vector<16x24xf32>
    %c0_5 = arith.constant 0 : index
    %c0_6 = arith.constant 0 : index
    %6 = vector.load %arg4[%c0_5, %c0_6] : memref<16x24xf32, #tpu.memory_space<vmem>>, vector<16x24xf32>
    tpu.vector_store %arg4[%c0_5, %c0_6], %5 {strides = array<i32>} : memref<16x24xf32, #tpu.memory_space<vmem>>, vector<16x24xf32>,
    return
  }
  func.func @transform_0(%arg0: i32) -> (i32, i32) {
    %c0_i32 = arith.constant 0 : i32
    %c0_i32_0 = arith.constant 0 : i32
    return %arg0, %c0_i32 : i32, i32
  }
  func.func @transform_1(%arg0: i32) -> (i32, i32) {
    %c0_i32 = arith.constant 0 : i32
    %c0_i32_0 = arith.constant 0 : i32
    %c0_i32_1 = arith.constant 0 : i32
    return %c0_i32, %c0_i32_0 : i32, i32
  }
  func.func @transform_2(%arg0: i32) -> (i32, i32) {
    %c0_i32 = arith.constant 0 : i32
    %c0_i32_0 = arith.constant 0 : i32
    %c0_i32_1 = arith.constant 0 : i32
    return %c0_i32, %c0_i32_0 : i32, i32
  }
  func.func @transform_3(%arg0: i32) -> (i32, i32) {
    %c0_i32 = arith.constant 0 : i32
    %c0_i32_0 = arith.constant 0 : i32
    return %arg0, %c0_i32 : i32, i32
  }
}

module attributes {stable_mosaic.version = 11 : i64} {
  func.func @_attn_layer_kernel(%arg0: i32, %arg1: memref<16x24xf32, #tpu.memory_space<vmem>>, %arg2: memref<1x24xf32, #tpu.memory_space<vmem>>, %arg3: memref<1x24xf32, #tpu.memory_space<vmem>>, %arg4: memref<24x72xbf16, #tpu.memory_space<vmem>>, %arg5: memref<1x72xf32, #tpu.memory_space<vmem>>, %arg6: memref<24x24xbf16, #tpu.memory_space<vmem>>, %arg7: memref<1x24xf32, #tpu.memory_space<vmem>>, %arg8: memref<1x24xf32, #tpu.memory_space<vmem>>, %arg9: memref<1x24xf32, #tpu.memory_space<vmem>>, %arg10: memref<24x96xbf16, #tpu.memory_space<vmem>>, %arg11: memref<1x96xf32, #tpu.memory_space<vmem>>, %arg12: memref<96x24xbf16, #tpu.memory_space<vmem>>, %arg13: memref<1x24xf32, #tpu.memory_space<vmem>>, %arg14: memref<16x24xf32, #tpu.memory_space<vmem>>) attributes {dimension_semantics = [#tpu.dimension_semantics<parallel>], iteration_bounds = array<i64: 2>, scalar_prefetch = 0 : i64, scratch_operands = 0 : i64, tpu.core_type = #tpu.core_type<tc>, window_params = [{transform_indices = @transform_0, window_bounds = array<i64: 16, 24>}, {pipeline_mode = #tpu.pipeline_mode<synchronous>, transform_indices = @transform_1, window_bounds = array<i64: 1, 24>}, {pipeline_mode = #tpu.pipeline_mode<synchronous>, transform_indices = @transform_2, window_bounds = array<i64: 1, 24>}, {pipeline_mode = #tpu.pipeline_mode<synchronous>, transform_indices = @transform_3, window_bounds = array<i64: 24, 72>}, {pipeline_mode = #tpu.pipeline_mode<synchronous>, transform_indices = @transform_4, window_bounds = array<i64: 1, 72>}, {pipeline_mode = #tpu.pipeline_mode<synchronous>, transform_indices = @transform_5, window_bounds = array<i64: 24, 24>}, {pipeline_mode = #tpu.pipeline_mode<synchronous>, transform_indices = @transform_6, window_bounds = array<i64: 1, 24>}, {pipeline_mode = #tpu.pipeline_mode<synchronous>, transform_indices = @transform_7, window_bounds = array<i64: 1, 24>}, {pipeline_mode = #tpu.pipeline_mode<synchronous>, transform_indices = @transform_8, window_bounds = array<i64: 1, 24>}, {pipeline_mode = #tpu.pipeline_mode<synchronous>, transform_indices = @transform_9, window_bounds = array<i64: 24, 96>}, {pipeline_mode = #tpu.pipeline_mode<synchronous>, transform_indices = @transform_10, window_bounds = array<i64: 1, 96>}, {pipeline_mode = #tpu.pipeline_mode<synchronous>, transform_indices = @transform_11, window_bounds = array<i64: 96, 24>}, {pipeline_mode = #tpu.pipeline_mode<synchronous>, transform_indices = @transform_12, window_bounds = array<i64: 1, 24>}, {transform_indices = @transform_13, window_bounds = array<i64: 16, 24>}]} {
    %c0 = arith.constant 0 : index
    %c0_0 = arith.constant 0 : index
    %0 = vector.load %arg1[%c0, %c0_0] : memref<16x24xf32, #tpu.memory_space<vmem>>, vector<16x24xf32>
    %1 = vector.shape_cast %0 : vector<16x24xf32> to vector<1x4x1x4x24xf32>
    %2 = vector.shape_cast %1 : vector<1x4x1x4x24xf32> to vector<16x24xf32>
    %cst = arith.constant dense<0.000000e+00> : vector<16xf32>
    %3 = vector.multi_reduction <add>, %2, %cst [1] : vector<16x24xf32> to vector<16xf32>
    %4 = vector.shape_cast %3 : vector<16xf32> to vector<16x1xf32>
    %cst_1 = arith.constant 2.400000e+01 : f32
    %5 = vector.broadcast %cst_1 : f32 to vector<16x1xf32>
    %6 = arith.divf %4, %5 : vector<16x1xf32>
    %7 = vector.broadcast %6 : vector<16x1xf32> to vector<16x24xf32>
    %8 = arith.subf %2, %7 : vector<16x24xf32>
    %9 = arith.mulf %8, %8 : vector<16x24xf32>
    %cst_2 = arith.constant dense<0.000000e+00> : vector<16xf32>
    %10 = vector.multi_reduction <add>, %9, %cst_2 [1] : vector<16x24xf32> to vector<16xf32>
    %11 = vector.shape_cast %10 : vector<16xf32> to vector<16x1xf32>
    %cst_3 = arith.constant 2.400000e+01 : f32
    %12 = vector.broadcast %cst_3 : f32 to vector<16x1xf32>
    %13 = arith.divf %11, %12 : vector<16x1xf32>
    %14 = vector.broadcast %6 : vector<16x1xf32> to vector<16x24xf32>
    %15 = arith.subf %2, %14 : vector<16x24xf32>
    %cst_4 = arith.constant 9.99999974E-6 : f32
    %16 = vector.broadcast %cst_4 : f32 to vector<16x1xf32>
    %17 = arith.addf %13, %16 : vector<16x1xf32>
    %18 = math.rsqrt %17 : vector<16x1xf32>
    %19 = vector.broadcast %18 : vector<16x1xf32> to vector<16x24xf32>
    %20 = arith.mulf %15, %19 : vector<16x24xf32>
    %c0_5 = arith.constant 0 : index
    %c0_6 = arith.constant 0 : index
    %21 = vector.load %arg2[%c0_5, %c0_6] : memref<1x24xf32, #tpu.memory_space<vmem>>, vector<1x24xf32>
    %22 = vector.broadcast %21 : vector<1x24xf32> to vector<16x24xf32>
    %23 = arith.mulf %20, %22 : vector<16x24xf32>
    %c0_7 = arith.constant 0 : index
    %c0_8 = arith.constant 0 : index
    %24 = vector.load %arg3[%c0_7, %c0_8] : memref<1x24xf32, #tpu.memory_space<vmem>>, vector<1x24xf32>
    %25 = vector.broadcast %24 : vector<1x24xf32> to vector<16x24xf32>
    %26 = arith.addf %23, %25 : vector<16x24xf32>
    %27 = arith.truncf %26 : vector<16x24xf32> to vector<16x24xbf16>
    %c0_9 = arith.constant 0 : index
    %c0_10 = arith.constant 0 : index
    %28 = vector.load %arg4[%c0_9, %c0_10] : memref<24x72xbf16, #tpu.memory_space<vmem>>, vector<24x72xbf16>
    %cst_11 = arith.constant dense<0.000000e+00> : vector<16x72xf32>
    %29 = tpu.matmul %27, %28, %cst_11 {dimension_numbers = #tpu.dot_dimension_numbers<[1], [0], [0], [1], [0, 0, 1, 1], [], []>} : vector<16x24xbf16>, vector<24x72xbf16>, vector<16x72xf32> -> vector<16x72xf32>
    %c0_12 = arith.constant 0 : index
    %c0_13 = arith.constant 0 : index
    %30 = vector.load %arg5[%c0_12, %c0_13] : memref<1x72xf32, #tpu.memory_space<vmem>>, vector<1x72xf32>
    %31 = vector.broadcast %30 : vector<1x72xf32> to vector<16x72xf32>
    %32 = arith.addf %29, %31 : vector<16x72xf32>
    %33 = vector.extract_strided_slice %32 {offsets = [0, 0], sizes = [16, 8], strides = [1, 1]} : vector<16x72xf32> to vector<16x8xf32>
    %34 = vector.shape_cast %33 : vector<16x8xf32> to vector<1x16x8xf32>
    %35 = arith.truncf %34 : vector<1x16x8xf32> to vector<1x16x8xbf16>
    %36 = vector.extract_strided_slice %32 {offsets = [0, 24], sizes = [16, 8], strides = [1, 1]} : vector<16x72xf32> to vector<16x8xf32>
    %37 = vector.shape_cast %36 : vector<16x8xf32> to vector<1x16x8xf32>
    %38 = arith.truncf %37 : vector<1x16x8xf32> to vector<1x16x8xbf16>
    %39 = vector.extract_strided_slice %32 {offsets = [0, 48], sizes = [16, 8], strides = [1, 1]} : vector<16x72xf32> to vector<16x8xf32>
    %40 = vector.shape_cast %39 : vector<16x8xf32> to vector<1x16x8xf32>
    %41 = arith.truncf %40 : vector<1x16x8xf32> to vector<1x16x8xbf16>
    "tpu.trace_start"() <{level = 10 : i32, message = "wqd,wkd->wqk"}> : () -> ()
    %cst_14 = arith.constant dense<0.000000e+00> : vector<1x16x16xf32>
    %42 = tpu.matmul %35, %38, %cst_14 {dimension_numbers = #tpu.dot_dimension_numbers<[2], [2], [1], [1], [0, 0, 0, 1, 1, 1], [0], [0]>} : vector<1x16x8xbf16>, vector<1x16x8xbf16>, vector<1x16x16xf32> -> vector<1x16x16xf32>
    "tpu.trace_stop"() : () -> ()
    %cst_15 = arith.constant dense<0xFF800000> : vector<1x16xf32>
    %43 = vector.multi_reduction <maximumf>, %42, %cst_15 [2] : vector<1x16x16xf32> to vector<1x16xf32>
    %44 = vector.shape_cast %43 : vector<1x16xf32> to vector<1x16x1xf32>
    %45 = vector.broadcast %44 : vector<1x16x1xf32> to vector<1x16x16xf32>
    %46 = arith.subf %42, %45 : vector<1x16x16xf32>
    %47 = math.exp %46 : vector<1x16x16xf32>
    %cst_16 = arith.constant dense<0.000000e+00> : vector<1x16xf32>
    %48 = vector.multi_reduction <add>, %47, %cst_16 [2] : vector<1x16x16xf32> to vector<1x16xf32>
    %49 = vector.shape_cast %48 : vector<1x16xf32> to vector<1x16x1xf32>
    %50 = arith.truncf %47 : vector<1x16x16xf32> to vector<1x16x16xbf16>
    "tpu.trace_start"() <{level = 10 : i32, message = "wqk,wkd->wqd"}> : () -> ()
    %cst_17 = arith.constant dense<0.000000e+00> : vector<1x16x8xf32>
    %51 = tpu.matmul %50, %41, %cst_17 {dimension_numbers = #tpu.dot_dimension_numbers<[2], [1], [1], [2], [0, 0, 0, 1, 1, 2], [0], [0]>} : vector<1x16x16xbf16>, vector<1x16x8xbf16>, vector<1x16x8xf32> -> vector<1x16x8xf32>
    "tpu.trace_stop"() : () -> ()
    %52 = tpu.reciprocal %49 {approx = true} : vector<1x16x1xf32> -> vector<1x16x1xf32>
    %53 = vector.broadcast %52 : vector<1x16x1xf32> to vector<1x16x8xf32>
    %54 = arith.mulf %51, %53 : vector<1x16x8xf32>
    %55 = vector.shape_cast %54 : vector<1x16x8xf32> to vector<16x8xf32>
    %56 = vector.extract_strided_slice %32 {offsets = [0, 8], sizes = [16, 8], strides = [1, 1]} : vector<16x72xf32> to vector<16x8xf32>
    %57 = vector.shape_cast %56 : vector<16x8xf32> to vector<1x16x8xf32>
    %58 = arith.truncf %57 : vector<1x16x8xf32> to vector<1x16x8xbf16>
    %59 = vector.extract_strided_slice %32 {offsets = [0, 32], sizes = [16, 8], strides = [1, 1]} : vector<16x72xf32> to vector<16x8xf32>
    %60 = vector.shape_cast %59 : vector<16x8xf32> to vector<1x16x8xf32>
    %61 = arith.truncf %60 : vector<1x16x8xf32> to vector<1x16x8xbf16>
    %62 = vector.extract_strided_slice %32 {offsets = [0, 56], sizes = [16, 8], strides = [1, 1]} : vector<16x72xf32> to vector<16x8xf32>
    %63 = vector.shape_cast %62 : vector<16x8xf32> to vector<1x16x8xf32>
    %64 = arith.truncf %63 : vector<1x16x8xf32> to vector<1x16x8xbf16>
    "tpu.trace_start"() <{level = 10 : i32, message = "wqd,wkd->wqk"}> : () -> ()
    %cst_18 = arith.constant dense<0.000000e+00> : vector<1x16x16xf32>
    %65 = tpu.matmul %58, %61, %cst_18 {dimension_numbers = #tpu.dot_dimension_numbers<[2], [2], [1], [1], [0, 0, 0, 1, 1, 1], [0], [0]>} : vector<1x16x8xbf16>, vector<1x16x8xbf16>, vector<1x16x16xf32> -> vector<1x16x16xf32>
    "tpu.trace_stop"() : () -> ()
    %cst_19 = arith.constant dense<0xFF800000> : vector<1x16xf32>
    %66 = vector.multi_reduction <maximumf>, %65, %cst_19 [2] : vector<1x16x16xf32> to vector<1x16xf32>
    %67 = vector.shape_cast %66 : vector<1x16xf32> to vector<1x16x1xf32>
    %68 = vector.broadcast %67 : vector<1x16x1xf32> to vector<1x16x16xf32>
    %69 = arith.subf %65, %68 : vector<1x16x16xf32>
    %70 = math.exp %69 : vector<1x16x16xf32>
    %cst_20 = arith.constant dense<0.000000e+00> : vector<1x16xf32>
    %71 = vector.multi_reduction <add>, %70, %cst_20 [2] : vector<1x16x16xf32> to vector<1x16xf32>
    %72 = vector.shape_cast %71 : vector<1x16xf32> to vector<1x16x1xf32>
    %73 = arith.truncf %70 : vector<1x16x16xf32> to vector<1x16x16xbf16>
    "tpu.trace_start"() <{level = 10 : i32, message = "wqk,wkd->wqd"}> : () -> ()
    %cst_21 = arith.constant dense<0.000000e+00> : vector<1x16x8xf32>
    %74 = tpu.matmul %73, %64, %cst_21 {dimension_numbers = #tpu.dot_dimension_numbers<[2], [1], [1], [2], [0, 0, 0, 1, 1, 2], [0], [0]>} : vector<1x16x16xbf16>, vector<1x16x8xbf16>, vector<1x16x8xf32> -> vector<1x16x8xf32>
    "tpu.trace_stop"() : () -> ()
    %75 = tpu.reciprocal %72 {approx = true} : vector<1x16x1xf32> -> vector<1x16x1xf32>
    %76 = vector.broadcast %75 : vector<1x16x1xf32> to vector<1x16x8xf32>
    %77 = arith.mulf %74, %76 : vector<1x16x8xf32>
    %78 = vector.shape_cast %77 : vector<1x16x8xf32> to vector<16x8xf32>
    %79 = vector.extract_strided_slice %32 {offsets = [0, 16], sizes = [16, 8], strides = [1, 1]} : vector<16x72xf32> to vector<16x8xf32>
    %80 = vector.shape_cast %79 : vector<16x8xf32> to vector<1x16x8xf32>
    %81 = arith.truncf %80 : vector<1x16x8xf32> to vector<1x16x8xbf16>
    %82 = vector.extract_strided_slice %32 {offsets = [0, 40], sizes = [16, 8], strides = [1, 1]} : vector<16x72xf32> to vector<16x8xf32>
    %83 = vector.shape_cast %82 : vector<16x8xf32> to vector<1x16x8xf32>
    %84 = arith.truncf %83 : vector<1x16x8xf32> to vector<1x16x8xbf16>
    %85 = vector.extract_strided_slice %32 {offsets = [0, 64], sizes = [16, 8], strides = [1, 1]} : vector<16x72xf32> to vector<16x8xf32>
    %86 = vector.shape_cast %85 : vector<16x8xf32> to vector<1x16x8xf32>
    %87 = arith.truncf %86 : vector<1x16x8xf32> to vector<1x16x8xbf16>
    "tpu.trace_start"() <{level = 10 : i32, message = "wqd,wkd->wqk"}> : () -> ()
    %cst_22 = arith.constant dense<0.000000e+00> : vector<1x16x16xf32>
    %88 = tpu.matmul %81, %84, %cst_22 {dimension_numbers = #tpu.dot_dimension_numbers<[2], [2], [1], [1], [0, 0, 0, 1, 1, 1], [0], [0]>} : vector<1x16x8xbf16>, vector<1x16x8xbf16>, vector<1x16x16xf32> -> vector<1x16x16xf32>
    "tpu.trace_stop"() : () -> ()
    %cst_23 = arith.constant dense<0xFF800000> : vector<1x16xf32>
    %89 = vector.multi_reduction <maximumf>, %88, %cst_23 [2] : vector<1x16x16xf32> to vector<1x16xf32>
    %90 = vector.shape_cast %89 : vector<1x16xf32> to vector<1x16x1xf32>
    %91 = vector.broadcast %90 : vector<1x16x1xf32> to vector<1x16x16xf32>
    %92 = arith.subf %88, %91 : vector<1x16x16xf32>
    %93 = math.exp %92 : vector<1x16x16xf32>
    %cst_24 = arith.constant dense<0.000000e+00> : vector<1x16xf32>
    %94 = vector.multi_reduction <add>, %93, %cst_24 [2] : vector<1x16x16xf32> to vector<1x16xf32>
    %95 = vector.shape_cast %94 : vector<1x16xf32> to vector<1x16x1xf32>
    %96 = arith.truncf %93 : vector<1x16x16xf32> to vector<1x16x16xbf16>
    "tpu.trace_start"() <{level = 10 : i32, message = "wqk,wkd->wqd"}> : () -> ()
    %cst_25 = arith.constant dense<0.000000e+00> : vector<1x16x8xf32>
    %97 = tpu.matmul %96, %87, %cst_25 {dimension_numbers = #tpu.dot_dimension_numbers<[2], [1], [1], [2], [0, 0, 0, 1, 1, 2], [0], [0]>} : vector<1x16x16xbf16>, vector<1x16x8xbf16>, vector<1x16x8xf32> -> vector<1x16x8xf32>
    "tpu.trace_stop"() : () -> ()
    %98 = tpu.reciprocal %95 {approx = true} : vector<1x16x1xf32> -> vector<1x16x1xf32>
    %99 = vector.broadcast %98 : vector<1x16x1xf32> to vector<1x16x8xf32>
    %100 = arith.mulf %97, %99 : vector<1x16x8xf32>
    %101 = vector.shape_cast %100 : vector<1x16x8xf32> to vector<16x8xf32>
    %102 = tpu.concatenate %55, %78, %101 in 1 : vector<16x8xf32>, vector<16x8xf32>, vector<16x8xf32> -> vector<16x24xf32>
    %103 = arith.truncf %102 : vector<16x24xf32> to vector<16x24xbf16>
    %c0_26 = arith.constant 0 : index
    %c0_27 = arith.constant 0 : index
    %104 = vector.load %arg6[%c0_26, %c0_27] : memref<24x24xbf16, #tpu.memory_space<vmem>>, vector<24x24xbf16>
    %cst_28 = arith.constant dense<0.000000e+00> : vector<16x24xf32>
    %105 = tpu.matmul %103, %104, %cst_28 {dimension_numbers = #tpu.dot_dimension_numbers<[1], [0], [0], [1], [0, 0, 1, 1], [], []>} : vector<16x24xbf16>, vector<24x24xbf16>, vector<16x24xf32> -> vector<16x24xf32>
    %c0_29 = arith.constant 0 : index
    %c0_30 = arith.constant 0 : index
    %106 = vector.load %arg7[%c0_29, %c0_30] : memref<1x24xf32, #tpu.memory_space<vmem>>, vector<1x24xf32>
    %107 = vector.broadcast %106 : vector<1x24xf32> to vector<16x24xf32>
    %108 = arith.addf %105, %107 : vector<16x24xf32>
    %109 = arith.addf %2, %108 : vector<16x24xf32>
    %cst_31 = arith.constant dense<0.000000e+00> : vector<16xf32>
    %110 = vector.multi_reduction <add>, %109, %cst_31 [1] : vector<16x24xf32> to vector<16xf32>
    %111 = vector.shape_cast %110 : vector<16xf32> to vector<16x1xf32>
    %cst_32 = arith.constant 2.400000e+01 : f32
    %112 = vector.broadcast %cst_32 : f32 to vector<16x1xf32>
    %113 = arith.divf %111, %112 : vector<16x1xf32>
    %114 = vector.broadcast %113 : vector<16x1xf32> to vector<16x24xf32>
    %115 = arith.subf %109, %114 : vector<16x24xf32>
    %116 = arith.mulf %115, %115 : vector<16x24xf32>
    %cst_33 = arith.constant dense<0.000000e+00> : vector<16xf32>
    %117 = vector.multi_reduction <add>, %116, %cst_33 [1] : vector<16x24xf32> to vector<16xf32>
    %118 = vector.shape_cast %117 : vector<16xf32> to vector<16x1xf32>
    %cst_34 = arith.constant 2.400000e+01 : f32
    %119 = vector.broadcast %cst_34 : f32 to vector<16x1xf32>
    %120 = arith.divf %118, %119 : vector<16x1xf32>
    %121 = vector.broadcast %113 : vector<16x1xf32> to vector<16x24xf32>
    %122 = arith.subf %109, %121 : vector<16x24xf32>
    %cst_35 = arith.constant 9.99999974E-6 : f32
    %123 = vector.broadcast %cst_35 : f32 to vector<16x1xf32>
    %124 = arith.addf %120, %123 : vector<16x1xf32>
    %125 = math.rsqrt %124 : vector<16x1xf32>
    %126 = vector.broadcast %125 : vector<16x1xf32> to vector<16x24xf32>
    %127 = arith.mulf %122, %126 : vector<16x24xf32>
    %c0_36 = arith.constant 0 : index
    %c0_37 = arith.constant 0 : index
    %128 = vector.load %arg8[%c0_36, %c0_37] : memref<1x24xf32, #tpu.memory_space<vmem>>, vector<1x24xf32>
    %129 = vector.broadcast %128 : vector<1x24xf32> to vector<16x24xf32>
    %130 = arith.mulf %127, %129 : vector<16x24xf32>
    %c0_38 = arith.constant 0 : index
    %c0_39 = arith.constant 0 : index
    %131 = vector.load %arg9[%c0_38, %c0_39] : memref<1x24xf32, #tpu.memory_space<vmem>>, vector<1x24xf32>
    %132 = vector.broadcast %131 : vector<1x24xf32> to vector<16x24xf32>
    %133 = arith.addf %130, %132 : vector<16x24xf32>
    %134 = arith.truncf %133 : vector<16x24xf32> to vector<16x24xbf16>
    %c0_40 = arith.constant 0 : index
    %c0_41 = arith.constant 0 : index
    %135 = vector.load %arg10[%c0_40, %c0_41] : memref<24x96xbf16, #tpu.memory_space<vmem>>, vector<24x96xbf16>
    %cst_42 = arith.constant dense<0.000000e+00> : vector<16x96xf32>
    %136 = tpu.matmul %134, %135, %cst_42 {dimension_numbers = #tpu.dot_dimension_numbers<[1], [0], [0], [1], [0, 0, 1, 1], [], []>} : vector<16x24xbf16>, vector<24x96xbf16>, vector<16x96xf32> -> vector<16x96xf32>
    %c0_43 = arith.constant 0 : index
    %c0_44 = arith.constant 0 : index
    %137 = vector.load %arg11[%c0_43, %c0_44] : memref<1x96xf32, #tpu.memory_space<vmem>>, vector<1x96xf32>
    %138 = vector.broadcast %137 : vector<1x96xf32> to vector<16x96xf32>
    %139 = arith.addf %136, %138 : vector<16x96xf32>
    %140 = arith.mulf %139, %139 : vector<16x96xf32>
    %141 = arith.mulf %139, %140 : vector<16x96xf32>
    %cst_45 = arith.constant 4.471500e-02 : f32
    %142 = vector.broadcast %cst_45 : f32 to vector<16x96xf32>
    %143 = arith.mulf %142, %141 : vector<16x96xf32>
    %144 = arith.addf %139, %143 : vector<16x96xf32>
    %cst_46 = arith.constant 0.797884583 : f32
    %145 = vector.broadcast %cst_46 : f32 to vector<16x96xf32>
    %146 = arith.mulf %145, %144 : vector<16x96xf32>
    %147 = math.tanh %146 : vector<16x96xf32>
    %cst_47 = arith.constant 1.000000e+00 : f32
    %148 = vector.broadcast %cst_47 : f32 to vector<16x96xf32>
    %149 = arith.addf %148, %147 : vector<16x96xf32>
    %cst_48 = arith.constant 5.000000e-01 : f32
    %150 = vector.broadcast %cst_48 : f32 to vector<16x96xf32>
    %151 = arith.mulf %150, %149 : vector<16x96xf32>
    %152 = arith.mulf %139, %151 : vector<16x96xf32>
    %153 = arith.truncf %152 : vector<16x96xf32> to vector<16x96xbf16>
    %c0_49 = arith.constant 0 : index
    %c0_50 = arith.constant 0 : index
    %154 = vector.load %arg12[%c0_49, %c0_50] : memref<96x24xbf16, #tpu.memory_space<vmem>>, vector<96x24xbf16>
    %cst_51 = arith.constant dense<0.000000e+00> : vector<16x24xf32>
    %155 = tpu.matmul %153, %154, %cst_51 {dimension_numbers = #tpu.dot_dimension_numbers<[1], [0], [0], [1], [0, 0, 1, 1], [], []>} : vector<16x96xbf16>, vector<96x24xbf16>, vector<16x24xf32> -> vector<16x24xf32>
    %c0_52 = arith.constant 0 : index
    %c0_53 = arith.constant 0 : index
    %156 = vector.load %arg13[%c0_52, %c0_53] : memref<1x24xf32, #tpu.memory_space<vmem>>, vector<1x24xf32>
    %157 = vector.broadcast %156 : vector<1x24xf32> to vector<16x24xf32>
    %158 = arith.addf %155, %157 : vector<16x24xf32>
    %159 = arith.addf %109, %158 : vector<16x24xf32>
    %160 = vector.shape_cast %159 : vector<16x24xf32> to vector<1x1x4x4x24xf32>
    %161 = vector.shape_cast %160 : vector<1x1x4x4x24xf32> to vector<16x24xf32>
    %c0_54 = arith.constant 0 : index
    %c0_55 = arith.constant 0 : index
    %162 = vector.load %arg14[%c0_54, %c0_55] : memref<16x24xf32, #tpu.memory_space<vmem>>, vector<16x24xf32>
    tpu.vector_store %arg14[%c0_54, %c0_55], %161 {strides = array<i32>} : memref<16x24xf32, #tpu.memory_space<vmem>>, vector<16x24xf32>,
    return
  }
  func.func @transform_0(%arg0: i32) -> (i32, i32) {
    %c0_i32 = arith.constant 0 : i32
    %c0_i32_0 = arith.constant 0 : i32
    return %arg0, %c0_i32 : i32, i32
  }
  func.func @transform_1(%arg0: i32) -> (i32, i32) {
    %c0_i32 = arith.constant 0 : i32
    %c0_i32_0 = arith.constant 0 : i32
    %c0_i32_1 = arith.constant 0 : i32
    return %c0_i32, %c0_i32_0 : i32, i32
  }
  func.func @transform_2(%arg0: i32) -> (i32, i32) {
    %c0_i32 = arith.constant 0 : i32
    %c0_i32_0 = arith.constant 0 : i32
    %c0_i32_1 = arith.constant 0 : i32
    return %c0_i32, %c0_i32_0 : i32, i32
  }
  func.func @transform_3(%arg0: i32) -> (i32, i32) {
    %c0_i32 = arith.constant 0 : i32
    %c0_i32_0 = arith.constant 0 : i32
    %c0_i32_1 = arith.constant 0 : i32
    return %c0_i32, %c0_i32_0 : i32, i32
  }
  func.func @transform_4(%arg0: i32) -> (i32, i32) {
    %c0_i32 = arith.constant 0 : i32
    %c0_i32_0 = arith.constant 0 : i32
    %c0_i32_1 = arith.constant 0 : i32
    return %c0_i32, %c0_i32_0 : i32, i32
  }
  func.func @transform_5(%arg0: i32) -> (i32, i32) {
    %c0_i32 = arith.constant 0 : i32
    %c0_i32_0 = arith.constant 0 : i32
    %c0_i32_1 = arith.constant 0 : i32
    return %c0_i32, %c0_i32_0 : i32, i32
  }
  func.func @transform_6(%arg0: i32) -> (i32, i32) {
    %c0_i32 = arith.constant 0 : i32
    %c0_i32_0 = arith.constant 0 : i32
    %c0_i32_1 = arith.constant 0 : i32
    return %c0_i32, %c0_i32_0 : i32, i32
  }
  func.func @transform_7(%arg0: i32) -> (i32, i32) {
    %c0_i32 = arith.constant 0 : i32
    %c0_i32_0 = arith.constant 0 : i32
    %c0_i32_1 = arith.constant 0 : i32
    return %c0_i32, %c0_i32_0 : i32, i32
  }
  func.func @transform_8(%arg0: i32) -> (i32, i32) {
    %c0_i32 = arith.constant 0 : i32
    %c0_i32_0 = arith.constant 0 : i32
    %c0_i32_1 = arith.constant 0 : i32
    return %c0_i32, %c0_i32_0 : i32, i32
  }
  func.func @transform_9(%arg0: i32) -> (i32, i32) {
    %c0_i32 = arith.constant 0 : i32
    %c0_i32_0 = arith.constant 0 : i32
    %c0_i32_1 = arith.constant 0 : i32
    return %c0_i32, %c0_i32_0 : i32, i32
  }
  func.func @transform_10(%arg0: i32) -> (i32, i32) {
    %c0_i32 = arith.constant 0 : i32
    %c0_i32_0 = arith.constant 0 : i32
    %c0_i32_1 = arith.constant 0 : i32
    return %c0_i32, %c0_i32_0 : i32, i32
  }
  func.func @transform_11(%arg0: i32) -> (i32, i32) {
    %c0_i32 = arith.constant 0 : i32
    %c0_i32_0 = arith.constant 0 : i32
    %c0_i32_1 = arith.constant 0 : i32
    return %c0_i32, %c0_i32_0 : i32, i32
  }
  func.func @transform_12(%arg0: i32) -> (i32, i32) {
    %c0_i32 = arith.constant 0 : i32
    %c0_i32_0 = arith.constant 0 : i32
    %c0_i32_1 = arith.constant 0 : i32
    return %c0_i32, %c0_i32_0 : i32, i32
  }
  func.func @transform_13(%arg0: i32) -> (i32, i32) {
    %c0_i32 = arith.constant 0 : i32
    %c0_i32_0 = arith.constant 0 : i32
    return %arg0, %c0_i32 : i32, i32
  }
}

</mosaic_0001>

<llo_original>
// kernel: encoder_block_apply.3
$region0: #{encoder_block_apply.3}
  #allocation0 [shape = 'u32[]', space=smem, size = 0x4, offset = 0x4, fixed_abs, tag = 'smem constant byte address 0x4 - core index']
  #allocation1 [shape = 'u32[144,128]{1,0:T(1,128)}', space=vmem, size = 0x12000, scoped, tag = 'internal scratch']
  %s0 = inlined_call_operand.vmem [shape: bf16[32,64], index: 0, kind: input, shape index: {}]
  %s1 = inlined_call_operand.vmem [shape: bf16[64,24], index: 1, kind: input, shape index: {}]
  %s2 = inlined_call_operand.vmem [shape: f32[1,24], index: 2, kind: input, shape index: {}]
  %s3 = inlined_call_operand.vmem [shape: f32[32,24], index: 3, kind: output, shape index: {}]
  %s4 = sld [smem:[#allocation0]]
  $region45: #{encoder_block_apply.3} parent=0
    _
  %s6 = ssub.s32 1, %s4
  %s7 = scalar_select 0, %s6, %s4
  loop: start=0, step=1, limit=4
  $region2: #{encoder_block_apply.3} parent=0 // loop_pre_header
    _
  $region3: #{encoder_block_apply.3} parent=0 // loop_header
    %s9 = sphi 0, %s13
    %p10 = scmp.ge.s32.totalorder %s9, 4
    %s19 = sphi 0, %s21
    %s22 = sphi 0, %s19
    %s23 = sphi 0, %s22
    %s39 = sphi 0, %s23
    %s43 = sphi 0, %s43
    %s45 = sphi 0, %s43
    %s46 = sphi 0, %s45
    %s60 = sphi 0, %s46
    %s64 = sphi 0, %s64
    %s66 = sphi 0, %s64
    %s67 = sphi 0, %s66
    %s81 = sphi 0, %s67
    %s87 = sphi 0, %s89
    %s90 = sphi 0, %s87
    %s91 = sphi 0, %s90
    %s107 = sphi 0, %s91
  $region4: #{encoder_block_apply.3} parent=0 // loop_header_branch
    %12 = sbr.rel (%p10) target = $region8
  $region5: #{encoder_block_apply.3} parent=0 // loop_body
    %s14 = ssub.s32 %s9, 1
    %s15 = ssub.s32 %s9, 2
    %s16 = sadd.s32 %s9, 1
    %s17 = ssub.s32 %s9, %s16
    %p18 = scmp.eq.s32.totalorder %s17, 0
    %s20 = sadd.s32 %s19, 1
    %s21 = scalar_select %p18, %s19, %s20
    %p24 = pneg %p18
    %p25 = scmp.eq.s32.totalorder %s9, 1
    %p26 = por %p24, %p25
    %p27 = scmp.ne.s32.totalorder %s19, %s22
    %p28 = scmp.eq.s32.totalorder %s9, 0
    %p29 = por %p27, %p28
    %p30 = scmp.ne.s32.totalorder %s19, %s22
    %p31 = scmp.eq.s32.totalorder %s14, 1
    %p32 = por %p30, %p31
    %p33 = scmp.ne.s32.totalorder %s22, %s23
    %p34 = scmp.eq.s32.totalorder %s14, 0
    %p35 = por %p33, %p34
    %p36 = scmp.ne.s32.totalorder %s22, %s23
    %p37 = scmp.eq.s32.totalorder %s15, 1
    %p38 = por %p36, %p37
    %p40 = scmp.ne.s32.totalorder %s23, %s39
    %p41 = scmp.eq.s32.totalorder %s15, 0
    %p42 = por %p40, %p41
    %s44 = sadd.s32 %s43, 1
    %p47 = scmp.eq.s32.totalorder %s9, 1
    %p48 = scmp.ne.s32.totalorder %s43, %s45
    %p49 = scmp.eq.s32.totalorder %s9, 0
    %p50 = por %p48, %p49
    %p51 = scmp.ne.s32.totalorder %s43, %s45
    %p52 = scmp.eq.s32.totalorder %s14, 1
    %p53 = por %p51, %p52
    %p54 = scmp.ne.s32.totalorder %s45, %s46
    %p55 = scmp.eq.s32.totalorder %s14, 0
    %p56 = por %p54, %p55
    %p57 = scmp.ne.s32.totalorder %s45, %s46
    %p58 = scmp.eq.s32.totalorder %s15, 1
    %p59 = por %p57, %p58
    %p61 = scmp.ne.s32.totalorder %s46, %s60
    %p62 = scmp.eq.s32.totalorder %s15, 0
    %p63 = por %p61, %p62
    %s65 = sadd.s32 %s64, 1
    %p68 = scmp.eq.s32.totalorder %s9, 1
    %p69 = scmp.ne.s32.totalorder %s64, %s66
    %p70 = scmp.eq.s32.totalorder %s9, 0
    %p71 = por %p69, %p70
    %p72 = scmp.ne.s32.totalorder %s64, %s66
    %p73 = scmp.eq.s32.totalorder %s14, 1
    %p74 = por %p72, %p73
    %p75 = scmp.ne.s32.totalorder %s66, %s67
    %p76 = scmp.eq.s32.totalorder %s14, 0
    %p77 = por %p75, %p76
    %p78 = scmp.ne.s32.totalorder %s66, %s67
    %p79 = scmp.eq.s32.totalorder %s15, 1
    %p80 = por %p78, %p79
    %p82 = scmp.ne.s32.totalorder %s67, %s81
    %p83 = scmp.eq.s32.totalorder %s15, 0
    %p84 = por %p82, %p83
    %s85 = ssub.s32 %s9, %s16
    %p86 = scmp.eq.s32.totalorder %s85, 0
    %s88 = sadd.s32 %s87, 1
    %s89 = scalar_select %p86, %s87, %s88
    %p92 = pneg %p86
    %p93 = scmp.eq.s32.totalorder %s9, 1
    %p94 = por %p92, %p93
    %p95 = scmp.ne.s32.totalorder %s87, %s90
    %p96 = scmp.eq.s32.totalorder %s9, 0
    %p97 = por %p95, %p96
    %p98 = scmp.ne.s32.totalorder %s87, %s90
    %p99 = scmp.eq.s32.totalorder %s14, 1
    %p100 = por %p98, %p99
    %p101 = scmp.ne.s32.totalorder %s90, %s91
    %p102 = scmp.eq.s32.totalorder %s14, 0
    %p103 = por %p101, %p102
    %p104 = scmp.ne.s32.totalorder %s90, %s91
    %p105 = scmp.eq.s32.totalorder %s15, 1
    %p106 = por %p104, %p105
    %p108 = scmp.ne.s32.totalorder %s91, %s107
    %p109 = scmp.eq.s32.totalorder %s15, 0
    %p110 = por %p108, %p109
    %p111 = scmp.le.s32.totalorder 1, %s9
    %p112 = scmp.lt.s32.totalorder %s9, 3
    %p113 = pnand %p111, %p112
    %p114 = pneg %p113
    // Predicated region
    $region9: #{encoder_block_apply.3} parent=5 // pred_check
      _
    $region10: #{encoder_block_apply.3} parent=5 // pred_check_branch
      %116 = sbr.rel (%p113) target = $region12
    $region11: #{encoder_block_apply.3} parent=5 // pred_region
      %s117 = ssub.s32 %s9, 1
      // Predicated region
      $region13: #{encoder_block_apply.3} parent=11 // pred_check
        %p118 = pneg %p56
      $region14: #{encoder_block_apply.3} parent=11 // pred_check_branch
        %120 = sbr.rel (%p118) target = $region16
      $region15: #{encoder_block_apply.3} parent=11 // pred_region
        _
      $region16: #{encoder_block_apply.3} parent=11 // pred_fallthru
        _
      // Predicated region
      $region17: #{encoder_block_apply.3} parent=11 // pred_check
        %p121 = pneg %p77
      $region18: #{encoder_block_apply.3} parent=11 // pred_check_branch
        %123 = sbr.rel (%p121) target = $region20
      $region19: #{encoder_block_apply.3} parent=11 // pred_region
        _
      $region20: #{encoder_block_apply.3} parent=11 // pred_fallthru
        _
    $region12: #{encoder_block_apply.3} parent=5 // pred_fallthru
      _
    %p124 = scmp.lt.s32.totalorder %s9, 2
    // Predicated region
    $region21: #{encoder_block_apply.3} parent=5 // pred_check
      %p125 = pneg %p124
    $region22: #{encoder_block_apply.3} parent=5 // pred_check_branch
      %127 = sbr.rel (%p125) target = $region24
    $region23: #{encoder_block_apply.3} parent=5 // pred_region
      // Predicated region
      $region25: #{encoder_block_apply.3} parent=23 // pred_check
        %p128 = pneg %p29
      $region26: #{encoder_block_apply.3} parent=23 // pred_check_branch
        %130 = sbr.rel (%p128) target = $region28
      $region27: #{encoder_block_apply.3} parent=23 // pred_region
        %s131 = smul.u32 2, %s9
        %p132 = scmp.lt.s32.totalorder %s131, 3
        %s133 = scalar_select %p132, %s131, 3
        %s134 = smul.addr %s133, 4
        %s135 = scalar_lea.vmem %s0, %s134
        %s136 = smul.u32 2, %s9
      $region28: #{encoder_block_apply.3} parent=23 // pred_fallthru
        _
    $region24: #{encoder_block_apply.3} parent=5 // pred_fallthru
      _
    %p137 = scmp.le.s32.totalorder 1, %s9
    %p138 = scmp.lt.s32.totalorder %s9, 3
    %p139 = pnand %p137, %p138
    %p140 = pneg %p139
    // Predicated region
    $region29: #{encoder_block_apply.3} parent=5 // pred_check
      _
    $region30: #{encoder_block_apply.3} parent=5 // pred_check_branch
      %142 = sbr.rel (%p139) target = $region32
    $region31: #{encoder_block_apply.3} parent=5 // pred_region
      %s143 = ssub.s32 %s9, 1
      %s144 = smul.u32 2, %s14
      %p145 = scmp.lt.s32.totalorder %s144, 3
      %s146 = scalar_select %p145, %s144, 3
      %s147 = smul.addr %s146, 4
      %s148 = scalar_lea.vmem %s0, %s147
      %p149 = pneg %p35
      %p150 = pneg %p32
      %p151 = pneg %p56
      %p152 = pneg %p53
      %p153 = pneg %p77
      %p154 = pneg %p74
      %p155 = pneg %p103
      %p156 = pneg %p100
      %s157 = smul.u32 2, %s14
      %p158 = scmp.lt.s32.totalorder %s157, 3
      %s159 = scalar_select %p158, %s157, 3
      %s160 = smul.addr %s159, 8
      %s161 = scalar_lea.vmem %s3, %s160
      %s162 = smul.u32 2, %s14
      %p163 = scmp.lt.s32.totalorder %s162, 3
      %s164 = scalar_select %p163, %s162, 3
      %s165 = smul.addr %s164, 4
      %s166 = scalar_lea.vmem %s0, %s165
      %s167 = smul.u32 2, %s14
      %s168 = smul.u32 2, %s14
      %p169 = scmp.lt.s32.totalorder %s168, 3
      %s170 = scalar_select %p169, %s168, 3
      %s171 = smul.addr %s170, 8
      %s172 = scalar_lea.vmem %s3, %s171
      %s173 = smul.u32 2, %s14
      %v175 = vld [vmem:[%s166] sm:$0xf]
      %v176 = vld [vmem:[%s166 + $0x4] sm:$0xf]
      %v177 = vld [vmem:[%s1] sm:$0xf]
      %v178 = vld [vmem:[%s1 + $0x4] sm:$0xf]
      %v179 = vld [vmem:[%s1 + $0x8] sm:$0xf]
      %v180 = vld [vmem:[%s1 + $0xc] sm:$0xf]
      %v181 = vld [vmem:[%s1 + $0x10] sm:$0xf]
      %v182 = vld [vmem:[%s1 + $0x14] sm:$0xf]
      %v183 = vld [vmem:[%s1 + $0x18] sm:$0xf]
      %v184 = vld [vmem:[%s1 + $0x1c] sm:$0xf]
      %v185 = vld [vmem:[%s2] sm:$0x1]
      %v187 = vlaneseq
      %v188 = vshrl.u32 %v187, 7
      %v189 = vsub.s32 0, %v188
      %v190 = vrot.slane %v185, %v189
      %v194 = vunpack.c.l.b16 %v175
      %v195 = vunpack.c.l.b16 %v176
      %v196 = vpack.c.b16 %v195, %v194
      %v205 = vunpack.c.l.b16 %v177
      %v206 = vunpack.c.l.b16 %v178
      %v207 = vunpack.c.l.b16 %v179
      %v208 = vunpack.c.l.b16 %v180
      %v209 = vunpack.c.l.b16 %v181
      %v210 = vunpack.c.l.b16 %v182
      %v211 = vunpack.c.l.b16 %v183
      %v212 = vunpack.c.l.b16 %v184
      %v213 = vpack.c.b16 %v206, %v205
      %v214 = vpack.c.b16 %v208, %v207
      %v215 = vpack.c.b16 %v210, %v209
      %v216 = vpack.c.b16 %v212, %v211
      %vm221 = vcmask 523264
      %v223 = vsel %vm221, %v196, 0
      %225 = vmatprep.subr.bf16.mxu0 0
      %226 = vmatpush1.bf16.msra.mxu0 0
      %227 = vmatprep.subr.bf16.mxu0 0
      %228 = vmatpush1.bf16.msra.mxu0 0
      %229 = vmatprep.subr.bf16.mxu0 0
      %230 = vmatpush1.bf16.msra.mxu0 0
      %231 = vmatprep.subr.bf16.mxu0 0
      %232 = vmatpush1.bf16.msra.mxu0 0
      %233 = vmatprep.subr.bf16.mxu0 0
      %234 = vmatpush1.bf16.msra.mxu0 %v216
      %235 = vmatprep.subr.bf16.mxu0 0
      %236 = vmatpush1.bf16.msra.mxu0 %v215
      %237 = vmatprep.subr.bf16.mxu0 0
      %238 = vmatpush1.bf16.msra.mxu0 %v214
      %239 = vmatprep.subr.bf16.mxu0 0
      %240 = vmatpush1.bf16.msra.mxu0 %v213
      %241 = vmatprep.subr.bf16.mxu0 0
      %242 = vmatpush2.bf16.msra.mxu0 0
      %243 = vmatprep.subr.bf16.mxu0 0
      %244 = vmatpush2.bf16.msra.mxu0 0
      %245 = vmatprep.subr.bf16.mxu0 0
      %246 = vmatpush2.bf16.msra.mxu0 0
      %247 = vmatprep.subr.bf16.mxu0 0
      %248 = vmatpush2.bf16.msra.mxu0 0
      %249 = vmatprep.subr.bf16.mxu0 0
      %250 = vmatpush2.bf16.msra.mxu0 0
      %251 = vmatprep.subr.bf16.mxu0 0
      %252 = vmatpush2.bf16.msra.mxu0 0
      %253 = vmatprep.subr.bf16.mxu0 0
      %254 = vmatpush2.bf16.msra.mxu0 0
      %255 = vmatprep.subr.bf16.mxu0 0
      %256 = vmatpush2.bf16.msra.mxu0 0
      %257 = vmatprep.mubr.bf16.mxu0 0
      %258 = vmatmul.mubr.bf16.gmra.mxu0 %v223
      %v259 = vpop.f32.mrf.mxu0
      %v260 = vadd.f32 %v190, %v259
      %v261 = vpop.f32.mrf.mxu0
      %v262 = vpop.f32.mrf.mxu0
      %v263 = vadd.f32 %v190, %v262
      %v264 = vpop.f32.mrf.mxu0
      %265 = vdwg.mxu0
      %vm266 = vcmask 195584
      %267 = vst.msk [vmem:[%s172] sm:$0xff] %vm266, %v260
      %268 = vst.msk [vmem:[%s172 + $0x8] sm:$0xff] %vm266, %v263
      %s269 = smul.u32 2, %s14
      %p270 = scmp.lt.s32.totalorder %s269, 3
      %s271 = scalar_select %p270, %s269, 3
      %s272 = smul.addr %s271, 8
      %s273 = scalar_lea.vmem %s3, %s272
      // Predicated region
      $region33: #{encoder_block_apply.3} parent=31 // pred_check
        %p274 = pneg %p100
      $region34: #{encoder_block_apply.3} parent=31 // pred_check_branch
        %276 = sbr.rel (%p274) target = $region36
      $region35: #{encoder_block_apply.3} parent=31 // pred_region
        %s277 = smul.u32 2, %s14
      $region36: #{encoder_block_apply.3} parent=31 // pred_fallthru
        _
    $region32: #{encoder_block_apply.3} parent=5 // pred_fallthru
      _
    %p278 = scmp.le.s32.totalorder 2, %s9
    // Predicated region
    $region37: #{encoder_block_apply.3} parent=5 // pred_check
      %p279 = pneg %p278
    $region38: #{encoder_block_apply.3} parent=5 // pred_check_branch
      %281 = sbr.rel (%p279) target = $region40
    $region39: #{encoder_block_apply.3} parent=5 // pred_region
      %s282 = ssub.s32 %s9, 2
      // Predicated region
      $region41: #{encoder_block_apply.3} parent=39 // pred_check
        %p283 = pneg %p106
      $region42: #{encoder_block_apply.3} parent=39 // pred_check_branch
        %285 = sbr.rel (%p283) target = $region44
      $region43: #{encoder_block_apply.3} parent=39 // pred_region
        %s286 = smul.u32 2, %s15
        %p287 = scmp.lt.s32.totalorder %s286, 3
        %s288 = scalar_select %p287, %s286, 3
        %s289 = smul.addr %s288, 8
        %s290 = scalar_lea.vmem %s3, %s289
      $region44: #{encoder_block_apply.3} parent=39 // pred_fallthru
        _
    $region40: #{encoder_block_apply.3} parent=5 // pred_fallthru
      _
  $region6: #{encoder_block_apply.3} parent=0 // loop_footer
    %s13 = sadd.s32 1, %s9
  $region7: #{encoder_block_apply.3} parent=0 // loop_footer_branch
    %8 = sbr.rel target = $region3
  $region8: #{encoder_block_apply.3} parent=0 // loop_exit
    _

// kernel: encoder_block_apply.4
$region0: #{encoder_block_apply.4}
  #allocation0 [shape = 'u32[]', space=smem, size = 0x4, offset = 0x4, fixed_abs, tag = 'smem constant byte address 0x4 - core index']
  #allocation1 [shape = 'u32[144,128]{1,0:T(1,128)}', space=vmem, size = 0x12000, scoped, tag = 'internal scratch']
  %s0 = inlined_call_operand.vmem [shape: f32[32,24], index: 0, kind: input, shape index: {}]
  %s1 = inlined_call_operand.vmem [shape: f32[1,24], index: 1, kind: input, shape index: {}]
  %s2 = inlined_call_operand.vmem [shape: f32[1,24], index: 2, kind: input, shape index: {}]
  %s3 = inlined_call_operand.vmem [shape: bf16[24,72], index: 3, kind: input, shape index: {}]
  %s4 = inlined_call_operand.vmem [shape: f32[1,72], index: 4, kind: input, shape index: {}]
  %s5 = inlined_call_operand.vmem [shape: bf16[24,24], index: 5, kind: input, shape index: {}]
  %s6 = inlined_call_operand.vmem [shape: f32[1,24], index: 6, kind: input, shape index: {}]
  %s7 = inlined_call_operand.vmem [shape: f32[1,24], index: 7, kind: input, shape index: {}]
  %s8 = inlined_call_operand.vmem [shape: f32[1,24], index: 8, kind: input, shape index: {}]
  %s9 = inlined_call_operand.vmem [shape: bf16[24,96], index: 9, kind: input, shape index: {}]
  %s10 = inlined_call_operand.vmem [shape: f32[1,96], index: 10, kind: input, shape index: {}]
  %s11 = inlined_call_operand.vmem [shape: bf16[96,24], index: 11, kind: input, shape index: {}]
  %s12 = inlined_call_operand.vmem [shape: f32[1,24], index: 12, kind: input, shape index: {}]
  %s13 = inlined_call_operand.vmem [shape: f32[32,24], index: 13, kind: output, shape index: {}]
  %s14 = sld [smem:[#allocation0]]
  $region85: #{encoder_block_apply.4} parent=0
    _
  %s16 = ssub.s32 1, %s14
  %s17 = scalar_select 0, %s16, %s14
  loop: start=0, step=1, limit=4
  $region2: #{encoder_block_apply.4} parent=0 // loop_pre_header
    _
  $region3: #{encoder_block_apply.4} parent=0 // loop_header
    %s19 = sphi 0, %s23
    %p20 = scmp.ge.s32.totalorder %s19, 4
    %s29 = sphi 0, %s31
    %s32 = sphi 0, %s29
    %s33 = sphi 0, %s32
    %s49 = sphi 0, %s33
    %s53 = sphi 0, %s53
    %s55 = sphi 0, %s53
    %s56 = sphi 0, %s55
    %s70 = sphi 0, %s56
    %s74 = sphi 0, %s74
    %s76 = sphi 0, %s74
    %s77 = sphi 0, %s76
    %s91 = sphi 0, %s77
    %s95 = sphi 0, %s95
    %s97 = sphi 0, %s95
    %s98 = sphi 0, %s97
    %s112 = sphi 0, %s98
    %s116 = sphi 0, %s116
    %s118 = sphi 0, %s116
    %s119 = sphi 0, %s118
    %s133 = sphi 0, %s119
    %s137 = sphi 0, %s137
    %s139 = sphi 0, %s137
    %s140 = sphi 0, %s139
    %s154 = sphi 0, %s140
    %s158 = sphi 0, %s158
    %s160 = sphi 0, %s158
    %s161 = sphi 0, %s160
    %s175 = sphi 0, %s161
    %s179 = sphi 0, %s179
    %s181 = sphi 0, %s179
    %s182 = sphi 0, %s181
    %s196 = sphi 0, %s182
    %s200 = sphi 0, %s200
    %s202 = sphi 0, %s200
    %s203 = sphi 0, %s202
    %s217 = sphi 0, %s203
    %s221 = sphi 0, %s221
    %s223 = sphi 0, %s221
    %s224 = sphi 0, %s223
    %s238 = sphi 0, %s224
    %s242 = sphi 0, %s242
    %s244 = sphi 0, %s242
    %s245 = sphi 0, %s244
    %s259 = sphi 0, %s245
    %s263 = sphi 0, %s263
    %s265 = sphi 0, %s263
    %s266 = sphi 0, %s265
    %s280 = sphi 0, %s266
    %s284 = sphi 0, %s284
    %s286 = sphi 0, %s284
    %s287 = sphi 0, %s286
    %s301 = sphi 0, %s287
    %s307 = sphi 0, %s309
    %s310 = sphi 0, %s307
    %s311 = sphi 0, %s310
    %s327 = sphi 0, %s311
  $region4: #{encoder_block_apply.4} parent=0 // loop_header_branch
    %22 = sbr.rel (%p20) target = $region8
  $region5: #{encoder_block_apply.4} parent=0 // loop_body
    %s24 = ssub.s32 %s19, 1
    %s25 = ssub.s32 %s19, 2
    %s26 = sadd.s32 %s19, 1
    %s27 = ssub.s32 %s19, %s26
    %p28 = scmp.eq.s32.totalorder %s27, 0
    %s30 = sadd.s32 %s29, 1
    %s31 = scalar_select %p28, %s29, %s30
    %p34 = pneg %p28
    %p35 = scmp.eq.s32.totalorder %s19, 1
    %p36 = por %p34, %p35
    %p37 = scmp.ne.s32.totalorder %s29, %s32
    %p38 = scmp.eq.s32.totalorder %s19, 0
    %p39 = por %p37, %p38
    %p40 = scmp.ne.s32.totalorder %s29, %s32
    %p41 = scmp.eq.s32.totalorder %s24, 1
    %p42 = por %p40, %p41
    %p43 = scmp.ne.s32.totalorder %s32, %s33
    %p44 = scmp.eq.s32.totalorder %s24, 0
    %p45 = por %p43, %p44
    %p46 = scmp.ne.s32.totalorder %s32, %s33
    %p47 = scmp.eq.s32.totalorder %s25, 1
    %p48 = por %p46, %p47
    %p50 = scmp.ne.s32.totalorder %s33, %s49
    %p51 = scmp.eq.s32.totalorder %s25, 0
    %p52 = por %p50, %p51
    %s54 = sadd.s32 %s53, 1
    %p57 = scmp.eq.s32.totalorder %s19, 1
    %p58 = scmp.ne.s32.totalorder %s53, %s55
    %p59 = scmp.eq.s32.totalorder %s19, 0
    %p60 = por %p58, %p59
    %p61 = scmp.ne.s32.totalorder %s53, %s55
    %p62 = scmp.eq.s32.totalorder %s24, 1
    %p63 = por %p61, %p62
    %p64 = scmp.ne.s32.totalorder %s55, %s56
    %p65 = scmp.eq.s32.totalorder %s24, 0
    %p66 = por %p64, %p65
    %p67 = scmp.ne.s32.totalorder %s55, %s56
    %p68 = scmp.eq.s32.totalorder %s25, 1
    %p69 = por %p67, %p68
    %p71 = scmp.ne.s32.totalorder %s56, %s70
    %p72 = scmp.eq.s32.totalorder %s25, 0
    %p73 = por %p71, %p72
    %s75 = sadd.s32 %s74, 1
    %p78 = scmp.eq.s32.totalorder %s19, 1
    %p79 = scmp.ne.s32.totalorder %s74, %s76
    %p80 = scmp.eq.s32.totalorder %s19, 0
    %p81 = por %p79, %p80
    %p82 = scmp.ne.s32.totalorder %s74, %s76
    %p83 = scmp.eq.s32.totalorder %s24, 1
    %p84 = por %p82, %p83
    %p85 = scmp.ne.s32.totalorder %s76, %s77
    %p86 = scmp.eq.s32.totalorder %s24, 0
    %p87 = por %p85, %p86
    %p88 = scmp.ne.s32.totalorder %s76, %s77
    %p89 = scmp.eq.s32.totalorder %s25, 1
    %p90 = por %p88, %p89
    %p92 = scmp.ne.s32.totalorder %s77, %s91
    %p93 = scmp.eq.s32.totalorder %s25, 0
    %p94 = por %p92, %p93
    %s96 = sadd.s32 %s95, 1
    %p99 = scmp.eq.s32.totalorder %s19, 1
    %p100 = scmp.ne.s32.totalorder %s95, %s97
    %p101 = scmp.eq.s32.totalorder %s19, 0
    %p102 = por %p100, %p101
    %p103 = scmp.ne.s32.totalorder %s95, %s97
    %p104 = scmp.eq.s32.totalorder %s24, 1
    %p105 = por %p103, %p104
    %p106 = scmp.ne.s32.totalorder %s97, %s98
    %p107 = scmp.eq.s32.totalorder %s24, 0
    %p108 = por %p106, %p107
    %p109 = scmp.ne.s32.totalorder %s97, %s98
    %p110 = scmp.eq.s32.totalorder %s25, 1
    %p111 = por %p109, %p110
    %p113 = scmp.ne.s32.totalorder %s98, %s112
    %p114 = scmp.eq.s32.totalorder %s25, 0
    %p115 = por %p113, %p114
    %s117 = sadd.s32 %s116, 1
    %p120 = scmp.eq.s32.totalorder %s19, 1
    %p121 = scmp.ne.s32.totalorder %s116, %s118
    %p122 = scmp.eq.s32.totalorder %s19, 0
    %p123 = por %p121, %p122
    %p124 = scmp.ne.s32.totalorder %s116, %s118
    %p125 = scmp.eq.s32.totalorder %s24, 1
    %p126 = por %p124, %p125
    %p127 = scmp.ne.s32.totalorder %s118, %s119
    %p128 = scmp.eq.s32.totalorder %s24, 0
    %p129 = por %p127, %p128
    %p130 = scmp.ne.s32.totalorder %s118, %s119
    %p131 = scmp.eq.s32.totalorder %s25, 1
    %p132 = por %p130, %p131
    %p134 = scmp.ne.s32.totalorder %s119, %s133
    %p135 = scmp.eq.s32.totalorder %s25, 0
    %p136 = por %p134, %p135
    %s138 = sadd.s32 %s137, 1
    %p141 = scmp.eq.s32.totalorder %s19, 1
    %p142 = scmp.ne.s32.totalorder %s137, %s139
    %p143 = scmp.eq.s32.totalorder %s19, 0
    %p144 = por %p142, %p143
    %p145 = scmp.ne.s32.totalorder %s137, %s139
    %p146 = scmp.eq.s32.totalorder %s24, 1
    %p147 = por %p145, %p146
    %p148 = scmp.ne.s32.totalorder %s139, %s140
    %p149 = scmp.eq.s32.totalorder %s24, 0
    %p150 = por %p148, %p149
    %p151 = scmp.ne.s32.totalorder %s139, %s140
    %p152 = scmp.eq.s32.totalorder %s25, 1
    %p153 = por %p151, %p152
    %p155 = scmp.ne.s32.totalorder %s140, %s154
    %p156 = scmp.eq.s32.totalorder %s25, 0
    %p157 = por %p155, %p156
    %s159 = sadd.s32 %s158, 1
    %p162 = scmp.eq.s32.totalorder %s19, 1
    %p163 = scmp.ne.s32.totalorder %s158, %s160
    %p164 = scmp.eq.s32.totalorder %s19, 0
    %p165 = por %p163, %p164
    %p166 = scmp.ne.s32.totalorder %s158, %s160
    %p167 = scmp.eq.s32.totalorder %s24, 1
    %p168 = por %p166, %p167
    %p169 = scmp.ne.s32.totalorder %s160, %s161
    %p170 = scmp.eq.s32.totalorder %s24, 0
    %p171 = por %p169, %p170
    %p172 = scmp.ne.s32.totalorder %s160, %s161
    %p173 = scmp.eq.s32.totalorder %s25, 1
    %p174 = por %p172, %p173
    %p176 = scmp.ne.s32.totalorder %s161, %s175
    %p177 = scmp.eq.s32.totalorder %s25, 0
    %p178 = por %p176, %p177
    %s180 = sadd.s32 %s179, 1
    %p183 = scmp.eq.s32.totalorder %s19, 1
    %p184 = scmp.ne.s32.totalorder %s179, %s181
    %p185 = scmp.eq.s32.totalorder %s19, 0
    %p186 = por %p184, %p185
    %p187 = scmp.ne.s32.totalorder %s179, %s181
    %p188 = scmp.eq.s32.totalorder %s24, 1
    %p189 = por %p187, %p188
    %p190 = scmp.ne.s32.totalorder %s181, %s182
    %p191 = scmp.eq.s32.totalorder %s24, 0
    %p192 = por %p190, %p191
    %p193 = scmp.ne.s32.totalorder %s181, %s182
    %p194 = scmp.eq.s32.totalorder %s25, 1
    %p195 = por %p193, %p194
    %p197 = scmp.ne.s32.totalorder %s182, %s196
    %p198 = scmp.eq.s32.totalorder %s25, 0
    %p199 = por %p197, %p198
    %s201 = sadd.s32 %s200, 1
    %p204 = scmp.eq.s32.totalorder %s19, 1
    %p205 = scmp.ne.s32.totalorder %s200, %s202
    %p206 = scmp.eq.s32.totalorder %s19, 0
    %p207 = por %p205, %p206
    %p208 = scmp.ne.s32.totalorder %s200, %s202
    %p209 = scmp.eq.s32.totalorder %s24, 1
    %p210 = por %p208, %p209
    %p211 = scmp.ne.s32.totalorder %s202, %s203
    %p212 = scmp.eq.s32.totalorder %s24, 0
    %p213 = por %p211, %p212
    %p214 = scmp.ne.s32.totalorder %s202, %s203
    %p215 = scmp.eq.s32.totalorder %s25, 1
    %p216 = por %p214, %p215
    %p218 = scmp.ne.s32.totalorder %s203, %s217
    %p219 = scmp.eq.s32.totalorder %s25, 0
    %p220 = por %p218, %p219
    %s222 = sadd.s32 %s221, 1
    %p225 = scmp.eq.s32.totalorder %s19, 1
    %p226 = scmp.ne.s32.totalorder %s221, %s223
    %p227 = scmp.eq.s32.totalorder %s19, 0
    %p228 = por %p226, %p227
    %p229 = scmp.ne.s32.totalorder %s221, %s223
    %p230 = scmp.eq.s32.totalorder %s24, 1
    %p231 = por %p229, %p230
    %p232 = scmp.ne.s32.totalorder %s223, %s224
    %p233 = scmp.eq.s32.totalorder %s24, 0
    %p234 = por %p232, %p233
    %p235 = scmp.ne.s32.totalorder %s223, %s224
    %p236 = scmp.eq.s32.totalorder %s25, 1
    %p237 = por %p235, %p236
    %p239 = scmp.ne.s32.totalorder %s224, %s238
    %p240 = scmp.eq.s32.totalorder %s25, 0
    %p241 = por %p239, %p240
    %s243 = sadd.s32 %s242, 1
    %p246 = scmp.eq.s32.totalorder %s19, 1
    %p247 = scmp.ne.s32.totalorder %s242, %s244
    %p248 = scmp.eq.s32.totalorder %s19, 0
    %p249 = por %p247, %p248
    %p250 = scmp.ne.s32.totalorder %s242, %s244
    %p251 = scmp.eq.s32.totalorder %s24, 1
    %p252 = por %p250, %p251
    %p253 = scmp.ne.s32.totalorder %s244, %s245
    %p254 = scmp.eq.s32.totalorder %s24, 0
    %p255 = por %p253, %p254
    %p256 = scmp.ne.s32.totalorder %s244, %s245
    %p257 = scmp.eq.s32.totalorder %s25, 1
    %p258 = por %p256, %p257
    %p260 = scmp.ne.s32.totalorder %s245, %s259
    %p261 = scmp.eq.s32.totalorder %s25, 0
    %p262 = por %p260, %p261
    %s264 = sadd.s32 %s263, 1
    %p267 = scmp.eq.s32.totalorder %s19, 1
    %p268 = scmp.ne.s32.totalorder %s263, %s265
    %p269 = scmp.eq.s32.totalorder %s19, 0
    %p270 = por %p268, %p269
    %p271 = scmp.ne.s32.totalorder %s263, %s265
    %p272 = scmp.eq.s32.totalorder %s24, 1
    %p273 = por %p271, %p272
    %p274 = scmp.ne.s32.totalorder %s265, %s266
    %p275 = scmp.eq.s32.totalorder %s24, 0
    %p276 = por %p274, %p275
    %p277 = scmp.ne.s32.totalorder %s265, %s266
    %p278 = scmp.eq.s32.totalorder %s25, 1
    %p279 = por %p277, %p278
    %p281 = scmp.ne.s32.totalorder %s266, %s280
    %p282 = scmp.eq.s32.totalorder %s25, 0
    %p283 = por %p281, %p282
    %s285 = sadd.s32 %s284, 1
    %p288 = scmp.eq.s32.totalorder %s19, 1
    %p289 = scmp.ne.s32.totalorder %s284, %s286
    %p290 = scmp.eq.s32.totalorder %s19, 0
    %p291 = por %p289, %p290
    %p292 = scmp.ne.s32.totalorder %s284, %s286
    %p293 = scmp.eq.s32.totalorder %s24, 1
    %p294 = por %p292, %p293
    %p295 = scmp.ne.s32.totalorder %s286, %s287
    %p296 = scmp.eq.s32.totalorder %s24, 0
    %p297 = por %p295, %p296
    %p298 = scmp.ne.s32.totalorder %s286, %s287
    %p299 = scmp.eq.s32.totalorder %s25, 1
    %p300 = por %p298, %p299
    %p302 = scmp.ne.s32.totalorder %s287, %s301
    %p303 = scmp.eq.s32.totalorder %s25, 0
    %p304 = por %p302, %p303
    %s305 = ssub.s32 %s19, %s26
    %p306 = scmp.eq.s32.totalorder %s305, 0
    %s308 = sadd.s32 %s307, 1
    %s309 = scalar_select %p306, %s307, %s308
    %p312 = pneg %p306
    %p313 = scmp.eq.s32.totalorder %s19, 1
    %p314 = por %p312, %p313
    %p315 = scmp.ne.s32.totalorder %s307, %s310
    %p316 = scmp.eq.s32.totalorder %s19, 0
    %p317 = por %p315, %p316
    %p318 = scmp.ne.s32.totalorder %s307, %s310
    %p319 = scmp.eq.s32.totalorder %s24, 1
    %p320 = por %p318, %p319
    %p321 = scmp.ne.s32.totalorder %s310, %s311
    %p322 = scmp.eq.s32.totalorder %s24, 0
    %p323 = por %p321, %p322
    %p324 = scmp.ne.s32.totalorder %s310, %s311
    %p325 = scmp.eq.s32.totalorder %s25, 1
    %p326 = por %p324, %p325
    %p328 = scmp.ne.s32.totalorder %s311, %s327
    %p329 = scmp.eq.s32.totalorder %s25, 0
    %p330 = por %p328, %p329
    %p331 = scmp.le.s32.totalorder 1, %s19
    %p332 = scmp.lt.s32.totalorder %s19, 3
    %p333 = pnand %p331, %p332
    %p334 = pneg %p333
    // Predicated region
    $region9: #{encoder_block_apply.4} parent=5 // pred_check
      _
    $region10: #{encoder_block_apply.4} parent=5 // pred_check_branch
      %336 = sbr.rel (%p333) target = $region12
    $region11: #{encoder_block_apply.4} parent=5 // pred_region
      %s337 = ssub.s32 %s19, 1
      // Predicated region
      $region13: #{encoder_block_apply.4} parent=11 // pred_check
        %p338 = pneg %p66
      $region14: #{encoder_block_apply.4} parent=11 // pred_check_branch
        %340 = sbr.rel (%p338) target = $region16
      $region15: #{encoder_block_apply.4} parent=11 // pred_region
        _
      $region16: #{encoder_block_apply.4} parent=11 // pred_fallthru
        _
      // Predicated region
      $region17: #{encoder_block_apply.4} parent=11 // pred_check
        %p341 = pneg %p87
      $region18: #{encoder_block_apply.4} parent=11 // pred_check_branch
        %343 = sbr.rel (%p341) target = $region20
      $region19: #{encoder_block_apply.4} parent=11 // pred_region
        _
      $region20: #{encoder_block_apply.4} parent=11 // pred_fallthru
        _
      // Predicated region
      $region21: #{encoder_block_apply.4} parent=11 // pred_check
        %p344 = pneg %p108
      $region22: #{encoder_block_apply.4} parent=11 // pred_check_branch
        %346 = sbr.rel (%p344) target = $region24
      $region23: #{encoder_block_apply.4} parent=11 // pred_region
        _
      $region24: #{encoder_block_apply.4} parent=11 // pred_fallthru
        _
      // Predicated region
      $region25: #{encoder_block_apply.4} parent=11 // pred_check
        %p347 = pneg %p129
      $region26: #{encoder_block_apply.4} parent=11 // pred_check_branch
        %349 = sbr.rel (%p347) target = $region28
      $region27: #{encoder_block_apply.4} parent=11 // pred_region
        _
      $region28: #{encoder_block_apply.4} parent=11 // pred_fallthru
        _
      // Predicated region
      $region29: #{encoder_block_apply.4} parent=11 // pred_check
        %p350 = pneg %p150
      $region30: #{encoder_block_apply.4} parent=11 // pred_check_branch
        %352 = sbr.rel (%p350) target = $region32
      $region31: #{encoder_block_apply.4} parent=11 // pred_region
        _
      $region32: #{encoder_block_apply.4} parent=11 // pred_fallthru
        _
      // Predicated region
      $region33: #{encoder_block_apply.4} parent=11 // pred_check
        %p353 = pneg %p171
      $region34: #{encoder_block_apply.4} parent=11 // pred_check_branch
        %355 = sbr.rel (%p353) target = $region36
      $region35: #{encoder_block_apply.4} parent=11 // pred_region
        _
      $region36: #{encoder_block_apply.4} parent=11 // pred_fallthru
        _
      // Predicated region
      $region37: #{encoder_block_apply.4} parent=11 // pred_check
        %p356 = pneg %p192
      $region38: #{encoder_block_apply.4} parent=11 // pred_check_branch
        %358 = sbr.rel (%p356) target = $region40
      $region39: #{encoder_block_apply.4} parent=11 // pred_region
        _
      $region40: #{encoder_block_apply.4} parent=11 // pred_fallthru
        _
      // Predicated region
      $region41: #{encoder_block_apply.4} parent=11 // pred_check
        %p359 = pneg %p213
      $region42: #{encoder_block_apply.4} parent=11 // pred_check_branch
        %361 = sbr.rel (%p359) target = $region44
      $region43: #{encoder_block_apply.4} parent=11 // pred_region
        _
      $region44: #{encoder_block_apply.4} parent=11 // pred_fallthru
        _
      // Predicated region
      $region45: #{encoder_block_apply.4} parent=11 // pred_check
        %p362 = pneg %p234
      $region46: #{encoder_block_apply.4} parent=11 // pred_check_branch
        %364 = sbr.rel (%p362) target = $region48
      $region47: #{encoder_block_apply.4} parent=11 // pred_region
        _
      $region48: #{encoder_block_apply.4} parent=11 // pred_fallthru
        _
      // Predicated region
      $region49: #{encoder_block_apply.4} parent=11 // pred_check
        %p365 = pneg %p255
      $region50: #{encoder_block_apply.4} parent=11 // pred_check_branch
        %367 = sbr.rel (%p365) target = $region52
      $region51: #{encoder_block_apply.4} parent=11 // pred_region
        _
      $region52: #{encoder_block_apply.4} parent=11 // pred_fallthru
        _
      // Predicated region
      $region53: #{encoder_block_apply.4} parent=11 // pred_check
        %p368 = pneg %p276
      $region54: #{encoder_block_apply.4} parent=11 // pred_check_branch
        %370 = sbr.rel (%p368) target = $region56
      $region55: #{encoder_block_apply.4} parent=11 // pred_region
        _
      $region56: #{encoder_block_apply.4} parent=11 // pred_fallthru
        _
      // Predicated region
      $region57: #{encoder_block_apply.4} parent=11 // pred_check
        %p371 = pneg %p297
      $region58: #{encoder_block_apply.4} parent=11 // pred_check_branch
        %373 = sbr.rel (%p371) target = $region60
      $region59: #{encoder_block_apply.4} parent=11 // pred_region
        _
      $region60: #{encoder_block_apply.4} parent=11 // pred_fallthru
        _
    $region12: #{encoder_block_apply.4} parent=5 // pred_fallthru
      _
    %p374 = scmp.lt.s32.totalorder %s19, 2
    // Predicated region
    $region61: #{encoder_block_apply.4} parent=5 // pred_check
      %p375 = pneg %p374
    $region62: #{encoder_block_apply.4} parent=5 // pred_check_branch
      %377 = sbr.rel (%p375) target = $region64
    $region63: #{encoder_block_apply.4} parent=5 // pred_region
      // Predicated region
      $region65: #{encoder_block_apply.4} parent=63 // pred_check
        %p378 = pneg %p39
      $region66: #{encoder_block_apply.4} parent=63 // pred_check_branch
        %380 = sbr.rel (%p378) target = $region68
      $region67: #{encoder_block_apply.4} parent=63 // pred_region
        %s381 = smul.u32 2, %s19
        %p382 = scmp.lt.s32.totalorder %s381, 3
        %s383 = scalar_select %p382, %s381, 3
        %s384 = smul.addr %s383, 8
        %s385 = scalar_lea.vmem %s0, %s384
        %s386 = smul.u32 2, %s19
      $region68: #{encoder_block_apply.4} parent=63 // pred_fallthru
        _
    $region64: #{encoder_block_apply.4} parent=5 // pred_fallthru
      _
    %p387 = scmp.le.s32.totalorder 1, %s19
    %p388 = scmp.lt.s32.totalorder %s19, 3
    %p389 = pnand %p387, %p388
    %p390 = pneg %p389
    // Predicated region
    $region69: #{encoder_block_apply.4} parent=5 // pred_check
      _
    $region70: #{encoder_block_apply.4} parent=5 // pred_check_branch
      %392 = sbr.rel (%p389) target = $region72
    $region71: #{encoder_block_apply.4} parent=5 // pred_region
      %s393 = ssub.s32 %s19, 1
      %s394 = smul.u32 2, %s24
      %p395 = scmp.lt.s32.totalorder %s394, 3
      %s396 = scalar_select %p395, %s394, 3
      %s397 = smul.addr %s396, 8
      %s398 = scalar_lea.vmem %s0, %s397
      %p399 = pneg %p45
      %p400 = pneg %p42
      %p401 = pneg %p66
      %p402 = pneg %p63
      %p403 = pneg %p87
      %p404 = pneg %p84
      %p405 = pneg %p108
      %p406 = pneg %p105
      %p407 = pneg %p129
      %p408 = pneg %p126
      %p409 = pneg %p150
      %p410 = pneg %p147
      %p411 = pneg %p171
      %p412 = pneg %p168
      %p413 = pneg %p192
      %p414 = pneg %p189
      %p415 = pneg %p213
      %p416 = pneg %p210
      %p417 = pneg %p234
      %p418 = pneg %p231
      %p419 = pneg %p255
      %p420 = pneg %p252
      %p421 = pneg %p276
      %p422 = pneg %p273
      %p423 = pneg %p297
      %p424 = pneg %p294
      %p425 = pneg %p323
      %p426 = pneg %p320
      %s427 = smul.u32 2, %s24
      %p428 = scmp.lt.s32.totalorder %s427, 3
      %s429 = scalar_select %p428, %s427, 3
      %s430 = smul.addr %s429, 8
      %s431 = scalar_lea.vmem %s13, %s430
      %s432 = smul.u32 2, %s24
      %p433 = scmp.lt.s32.totalorder %s432, 3
      %s434 = scalar_select %p433, %s432, 3
      %s435 = smul.addr %s434, 8
      %s436 = scalar_lea.vmem %s0, %s435
      %s437 = smul.u32 2, %s24
      %s438 = smul.u32 2, %s24
      %p439 = scmp.lt.s32.totalorder %s438, 3
      %s440 = scalar_select %p439, %s438, 3
      %s441 = smul.addr %s440, 8
      %s442 = scalar_lea.vmem %s13, %s441
      %s443 = smul.u32 2, %s24
      %v445 = vld [vmem:[%s436] sm:$0xff]
      %v446 = vld [vmem:[%s436 + $0x8] sm:$0xff]
      %vm447 = vcmask 195584
      %v448 = vsel %vm447, %v445, 0.0
      %449 = vadd.xlane.f32.xlu0 %v448
      %v450 = vpop.xlane.xlu0 %449
      %v451 = vsel %vm447, %v446, 0.0
      %452 = vadd.xlane.f32.xlu0 %v451
      %v453 = vpop.xlane.xlu0 %452
      %v454 = vrcp.pop 24.0
      %v455 = vmul.f32 %v450, %v454
      %v456 = vmul.f32 %v453, %v454
      %v457 = vsub.f32 %v445, %v455
      %v458 = vsub.f32 %v446, %v456
      %v459 = vmul.f32 %v457, %v457
      %v460 = vmul.f32 %v458, %v458
      %v461 = vsel %vm447, %v459, 0.0
      %462 = vadd.xlane.f32.xlu0 %v461
      %v463 = vpop.xlane.xlu0 %462
      %v464 = vsel %vm447, %v460, 0.0
      %465 = vadd.xlane.f32.xlu0 %v464
      %v466 = vpop.xlane.xlu0 %465
      %v467 = vmul.f32 %v463, %v454
      %v468 = vmul.f32 %v466, %v454
      %v469 = vadd.f32 %v467, 1e-05
      %v470 = vadd.f32 %v468, 1e-05
      %v471 = vrsqrt.pop %v469
      %v472 = vrsqrt.pop %v470
      %v473 = vmul.f32 %v457, %v471
      %v474 = vmul.f32 %v458, %v472
      %v475 = vld [vmem:[%s1] sm:$0x1]
      %v477 = vlaneseq
      %v478 = vshrl.u32 %v477, 7
      %v479 = vsub.s32 0, %v478
      %v480 = vrot.slane %v475, %v479
      %v482 = vmul.f32 %v473, %v480
      %v483 = vmul.f32 %v474, %v480
      %v484 = vld [vmem:[%s2] sm:$0x1]
      %v486 = vlaneseq
      %v487 = vshrl.u32 %v486, 7
      %v488 = vsub.s32 0, %v487
      %v489 = vrot.slane %v484, %v488
      %v491 = vadd.f32 %v482, %v489
      %v492 = vadd.f32 %v483, %v489
      %v493 = vpack.c.bf16 %v492, %v491
      %v494 = vld [vmem:[%s3] sm:$0xf]
      %v495 = vld [vmem:[%s3 + $0x4] sm:$0xf]
      %v496 = vld [vmem:[%s3 + $0x8] sm:$0xf]
      %v497 = vld [vmem:[%s4] sm:$0x1]
      %v499 = vlaneseq
      %v500 = vshrl.u32 %v499, 7
      %v501 = vsub.s32 0, %v500
      %v502 = vrot.slane %v497, %v501
      %v507 = vunpack.c.l.b16 %v494
      %v508 = vunpack.c.l.b16 %v495
      %v509 = vunpack.c.l.b16 %v496
      %v510 = vpack.c.b16 %v508, %v507
      %v511 = vpack.c.b16 %v509, %v509
      %v514 = vsel %vm447, %v493, 0
      %vm516 = vcmask 1043456
      %v518 = vsel %vm516, %v511, 0
      %520 = vmatprep.subr.bf16.mxu0 0
      %521 = vmatpush1.bf16.msra.mxu0 0
      %522 = vmatprep.subr.bf16.mxu0 0
      %523 = vmatpush1.bf16.msra.mxu0 0
      %524 = vmatprep.subr.bf16.mxu0 0
      %525 = vmatpush1.bf16.msra.mxu0 0
      %526 = vmatprep.subr.bf16.mxu0 0
      %527 = vmatpush1.bf16.msra.mxu0 0
      %528 = vmatprep.subr.bf16.mxu0 0
      %529 = vmatpush1.bf16.msra.mxu0 0
      %530 = vmatprep.subr.bf16.mxu0 0
      %531 = vmatpush1.bf16.msra.mxu0 0
      %532 = vmatprep.subr.bf16.mxu0 0
      %533 = vmatpush1.bf16.msra.mxu0 %v518
      %534 = vmatprep.subr.bf16.mxu0 0
      %535 = vmatpush1.bf16.msra.mxu0 %v510
      %536 = vmatprep.subr.bf16.mxu0 0
      %537 = vmatpush2.bf16.msra.mxu0 0
      %538 = vmatprep.subr.bf16.mxu0 0
      %539 = vmatpush2.bf16.msra.mxu0 0
      %540 = vmatprep.subr.bf16.mxu0 0
      %541 = vmatpush2.bf16.msra.mxu0 0
      %542 = vmatprep.subr.bf16.mxu0 0
      %543 = vmatpush2.bf16.msra.mxu0 0
      %544 = vmatprep.subr.bf16.mxu0 0
      %545 = vmatpush2.bf16.msra.mxu0 0
      %546 = vmatprep.subr.bf16.mxu0 0
      %547 = vmatpush2.bf16.msra.mxu0 0
      %548 = vmatprep.subr.bf16.mxu0 0
      %549 = vmatpush2.bf16.msra.mxu0 0
      %550 = vmatprep.subr.bf16.mxu0 0
      %551 = vmatpush2.bf16.msra.mxu0 0
      %552 = vmatprep.mubr.bf16.mxu0 0
      %553 = vmatmul.mubr.bf16.gmra.mxu0 %v514
      %v554 = vpop.f32.mrf.mxu0
      %v555 = vadd.f32 %v502, %v554
      %v556 = vpop.f32.mrf.mxu0
      %v557 = vpop.f32.mrf.mxu0
      %v558 = vadd.f32 %v502, %v557
      %v559 = vpop.f32.mrf.mxu0
      %560 = vdwg.mxu0
      %v561 = vpack.c.bf16 %v558, %v555
      %563 = vrot.lane.b32.xlu0 %v561, 104
      %v564 = vpop.permute.xlu0 %563
      %vm565 = vcmask 64512
      %v567 = vsel %vm565, %v561, 0
      %v570 = vsel %vm565, %v564, 0
      %572 = vmatprep.subr.bf16.mxu0 0
      %573 = vmatpush1.bf16.xpose.msra.mxu0 0
      %574 = vmatprep.subr.bf16.mxu0 0
      %575 = vmatpush1.bf16.xpose.msra.mxu0 0
      %576 = vmatprep.subr.bf16.mxu0 0
      %577 = vmatpush1.bf16.xpose.msra.mxu0 0
      %578 = vmatprep.subr.bf16.mxu0 0
      %579 = vmatpush1.bf16.xpose.msra.mxu0 0
      %580 = vmatprep.subr.bf16.mxu0 0
      %581 = vmatpush1.bf16.xpose.msra.mxu0 0
      %582 = vmatprep.subr.bf16.mxu0 0
      %583 = vmatpush1.bf16.xpose.msra.mxu0 0
      %584 = vmatprep.subr.bf16.mxu0 0
      %585 = vmatpush1.bf16.xpose.msra.mxu0 0
      %586 = vmatprep.subr.bf16.mxu0 0
      %587 = vmatpush1.bf16.xpose.msra.mxu0 %v570
      %588 = vmatprep.subr.bf16.mxu0 0
      %589 = vmatpush2.bf16.xpose.msra.mxu0 0
      %590 = vmatprep.subr.bf16.mxu0 0
      %591 = vmatpush2.bf16.xpose.msra.mxu0 0
      %592 = vmatprep.subr.bf16.mxu0 0
      %593 = vmatpush2.bf16.xpose.msra.mxu0 0
      %594 = vmatprep.subr.bf16.mxu0 0
      %595 = vmatpush2.bf16.xpose.msra.mxu0 0
      %596 = vmatprep.subr.bf16.mxu0 0
      %597 = vmatpush2.bf16.xpose.msra.mxu0 0
      %598 = vmatprep.subr.bf16.mxu0 0
      %599 = vmatpush2.bf16.xpose.msra.mxu0 0
      %600 = vmatprep.subr.bf16.mxu0 0
      %601 = vmatpush2.bf16.xpose.msra.mxu0 0
      %602 = vmatprep.subr.bf16.mxu0 0
      %603 = vmatpush2.bf16.xpose.msra.mxu0 0
      %604 = vmatprep.mubr.bf16.mxu0 0
      %605 = vmatmul.mubr.bf16.gmra.mxu0 %v567
      %v606 = vpop.f32.mrf.mxu0
      %v607 = vadd.f32 0.0, %v606
      %v608 = vpop.f32.mrf.mxu0
      %v609 = vpop.f32.mrf.mxu0
      %v610 = vadd.f32 0.0, %v609
      %v611 = vpop.f32.mrf.mxu0
      %612 = vdwg.mxu0
      %vm613 = vcmask 130048
      %v614 = vsel %vm613, %v607, -inf
      %615 = vmax.xlane.f32.xlu0 %v614
      %v616 = vpop.xlane.xlu0 %615
      %v617 = vsel %vm613, %v610, -inf
      %618 = vmax.xlane.f32.xlu0 %v617
      %v619 = vpop.xlane.xlu0 %618
      %v620 = vsub.f32 %v607, %v616
      %v621 = vsub.f32 %v610, %v619
      %v622 = vmul.f32 %v620, 1.442695
      %v623 = vpow.pop %v622
      %v624 = vmul.f32 %v621, 1.442695
      %v625 = vpow.pop %v624
      %v626 = vsel %vm613, %v623, 0.0
      %627 = vadd.xlane.f32.xlu0 %v626
      %v628 = vpop.xlane.xlu0 %627
      %v629 = vsel %vm613, %v625, 0.0
      %630 = vadd.xlane.f32.xlu0 %v629
      %v631 = vpop.xlane.xlu0 %630
      %v632 = vpack.c.bf16 %v625, %v623
      %633 = vrot.lane.b32.xlu0 %v561, 80
      %v634 = vpop.permute.xlu0 %633
      %v637 = vsel %vm613, %v632, 0
      %639 = vmatprep.subr.bf16.mxu0 0
      %640 = vmatpush1.bf16.msra.mxu0 0
      %641 = vmatprep.subr.bf16.mxu0 0
      %642 = vmatpush1.bf16.msra.mxu0 0
      %643 = vmatprep.subr.bf16.mxu0 0
      %644 = vmatpush1.bf16.msra.mxu0 0
      %645 = vmatprep.subr.bf16.mxu0 0
      %646 = vmatpush1.bf16.msra.mxu0 0
      %647 = vmatprep.subr.bf16.mxu0 0
      %648 = vmatpush1.bf16.msra.mxu0 0
      %649 = vmatprep.subr.bf16.mxu0 0
      %650 = vmatpush1.bf16.msra.mxu0 0
      %651 = vmatprep.subr.bf16.mxu0 0
      %652 = vmatpush1.bf16.msra.mxu0 0
      %653 = vmatprep.subr.bf16.mxu0 0
      %654 = vmatpush1.bf16.msra.mxu0 %v634
      %655 = vmatprep.subr.bf16.mxu0 0
      %656 = vmatpush2.bf16.msra.mxu0 0
      %657 = vmatprep.subr.bf16.mxu0 0
      %658 = vmatpush2.bf16.msra.mxu0 0
      %659 = vmatprep.subr.bf16.mxu0 0
      %660 = vmatpush2.bf16.msra.mxu0 0
      %661 = vmatprep.subr.bf16.mxu0 0
      %662 = vmatpush2.bf16.msra.mxu0 0
      %663 = vmatprep.subr.bf16.mxu0 0
      %664 = vmatpush2.bf16.msra.mxu0 0
      %665 = vmatprep.subr.bf16.mxu0 0
      %666 = vmatpush2.bf16.msra.mxu0 0
      %667 = vmatprep.subr.bf16.mxu0 0
      %668 = vmatpush2.bf16.msra.mxu0 0
      %669 = vmatprep.subr.bf16.mxu0 0
      %670 = vmatpush2.bf16.msra.mxu0 0
      %671 = vmatprep.mubr.bf16.mxu0 0
      %672 = vmatmul.mubr.bf16.gmra.mxu0 %v637
      %v673 = vpop.f32.mrf.mxu0
      %v674 = vadd.f32 0.0, %v673
      %v675 = vpop.f32.mrf.mxu0
      %v676 = vpop.f32.mrf.mxu0
      %v677 = vadd.f32 0.0, %v676
      %v678 = vpop.f32.mrf.mxu0
      %679 = vdwg.mxu0
      %v680 = vrcp.pop %v628
      %v681 = vrcp.pop %v631
      %v682 = vmul.f32 %v674, %v680
      %v683 = vmul.f32 %v677, %v681
      %684 = vrot.lane.b32.xlu0 %v561, 120
      %v685 = vpop.permute.xlu0 %684
      %686 = vrot.lane.b32.xlu0 %v561, 96
      %v687 = vpop.permute.xlu0 %686
      %v689 = vsel %vm565, %v685, 0
      %v692 = vsel %vm565, %v687, 0
      %694 = vmatprep.subr.bf16.mxu0 0
      %695 = vmatpush1.bf16.xpose.msra.mxu0 0
      %696 = vmatprep.subr.bf16.mxu0 0
      %697 = vmatpush1.bf16.xpose.msra.mxu0 0
      %698 = vmatprep.subr.bf16.mxu0 0
      %699 = vmatpush1.bf16.xpose.msra.mxu0 0
      %700 = vmatprep.subr.bf16.mxu0 0
      %701 = vmatpush1.bf16.xpose.msra.mxu0 0
      %702 = vmatprep.subr.bf16.mxu0 0
      %703 = vmatpush1.bf16.xpose.msra.mxu0 0
      %704 = vmatprep.subr.bf16.mxu0 0
      %705 = vmatpush1.bf16.xpose.msra.mxu0 0
      %706 = vmatprep.subr.bf16.mxu0 0
      %707 = vmatpush1.bf16.xpose.msra.mxu0 0
      %708 = vmatprep.subr.bf16.mxu0 0
      %709 = vmatpush1.bf16.xpose.msra.mxu0 %v692
      %710 = vmatprep.subr.bf16.mxu0 0
      %711 = vmatpush2.bf16.xpose.msra.mxu0 0
      %712 = vmatprep.subr.bf16.mxu0 0
      %713 = vmatpush2.bf16.xpose.msra.mxu0 0
      %714 = vmatprep.subr.bf16.mxu0 0
      %715 = vmatpush2.bf16.xpose.msra.mxu0 0
      %716 = vmatprep.subr.bf16.mxu0 0
      %717 = vmatpush2.bf16.xpose.msra.mxu0 0
      %718 = vmatprep.subr.bf16.mxu0 0
      %719 = vmatpush2.bf16.xpose.msra.mxu0 0
      %720 = vmatprep.subr.bf16.mxu0 0
      %721 = vmatpush2.bf16.xpose.msra.mxu0 0
      %722 = vmatprep.subr.bf16.mxu0 0
      %723 = vmatpush2.bf16.xpose.msra.mxu0 0
      %724 = vmatprep.subr.bf16.mxu0 0
      %725 = vmatpush2.bf16.xpose.msra.mxu0 0
      %726 = vmatprep.mubr.bf16.mxu0 0
      %727 = vmatmul.mubr.bf16.gmra.mxu0 %v689
      %v728 = vpop.f32.mrf.mxu0
      %v729 = vadd.f32 0.0, %v728
      %v730 = vpop.f32.mrf.mxu0
      %v731 = vpop.f32.mrf.mxu0
      %v732 = vadd.f32 0.0, %v731
      %v733 = vpop.f32.mrf.mxu0
      %734 = vdwg.mxu0
      %v735 = vsel %vm613, %v729, -inf
      %736 = vmax.xlane.f32.xlu0 %v735
      %v737 = vpop.xlane.xlu0 %736
      %v738 = vsel %vm613, %v732, -inf
      %739 = vmax.xlane.f32.xlu0 %v738
      %v740 = vpop.xlane.xlu0 %739
      %v741 = vsub.f32 %v729, %v737
      %v742 = vsub.f32 %v732, %v740
      %v743 = vmul.f32 %v741, 1.442695
      %v744 = vpow.pop %v743
      %v745 = vmul.f32 %v742, 1.442695
      %v746 = vpow.pop %v745
      %v747 = vsel %vm613, %v744, 0.0
      %748 = vadd.xlane.f32.xlu0 %v747
      %v749 = vpop.xlane.xlu0 %748
      %v750 = vsel %vm613, %v746, 0.0
      %751 = vadd.xlane.f32.xlu0 %v750
      %v752 = vpop.xlane.xlu0 %751
      %v753 = vpack.c.bf16 %v746, %v744
      %754 = vrot.lane.b32.xlu0 %v561, 72
      %v755 = vpop.permute.xlu0 %754
      %v758 = vsel %vm613, %v753, 0
      %760 = vmatprep.subr.bf16.mxu0 0
      %761 = vmatpush1.bf16.msra.mxu0 0
      %762 = vmatprep.subr.bf16.mxu0 0
      %763 = vmatpush1.bf16.msra.mxu0 0
      %764 = vmatprep.subr.bf16.mxu0 0
      %765 = vmatpush1.bf16.msra.mxu0 0
      %766 = vmatprep.subr.bf16.mxu0 0
      %767 = vmatpush1.bf16.msra.mxu0 0
      %768 = vmatprep.subr.bf16.mxu0 0
      %769 = vmatpush1.bf16.msra.mxu0 0
      %770 = vmatprep.subr.bf16.mxu0 0
      %771 = vmatpush1.bf16.msra.mxu0 0
      %772 = vmatprep.subr.bf16.mxu0 0
      %773 = vmatpush1.bf16.msra.mxu0 0
      %774 = vmatprep.subr.bf16.mxu0 0
      %775 = vmatpush1.bf16.msra.mxu0 %v755
      %776 = vmatprep.subr.bf16.mxu0 0
      %777 = vmatpush2.bf16.msra.mxu0 0
      %778 = vmatprep.subr.bf16.mxu0 0
      %779 = vmatpush2.bf16.msra.mxu0 0
      %780 = vmatprep.subr.bf16.mxu0 0
      %781 = vmatpush2.bf16.msra.mxu0 0
      %782 = vmatprep.subr.bf16.mxu0 0
      %783 = vmatpush2.bf16.msra.mxu0 0
      %784 = vmatprep.subr.bf16.mxu0 0
      %785 = vmatpush2.bf16.msra.mxu0 0
      %786 = vmatprep.subr.bf16.mxu0 0
      %787 = vmatpush2.bf16.msra.mxu0 0
      %788 = vmatprep.subr.bf16.mxu0 0
      %789 = vmatpush2.bf16.msra.mxu0 0
      %790 = vmatprep.subr.bf16.mxu0 0
      %791 = vmatpush2.bf16.msra.mxu0 0
      %792 = vmatprep.mubr.bf16.mxu0 0
      %793 = vmatmul.mubr.bf16.gmra.mxu0 %v758
      %v794 = vpop.f32.mrf.mxu0
      %v795 = vadd.f32 0.0, %v794
      %v796 = vpop.f32.mrf.mxu0
      %v797 = vpop.f32.mrf.mxu0
      %v798 = vadd.f32 0.0, %v797
      %v799 = vpop.f32.mrf.mxu0
      %800 = vdwg.mxu0
      %v801 = vrcp.pop %v749
      %v802 = vrcp.pop %v752
      %v803 = vmul.f32 %v795, %v801
      %v804 = vmul.f32 %v798, %v802
      %805 = vrot.lane.b32.xlu0 %v561, 112
      %v806 = vpop.permute.xlu0 %805
      %807 = vrot.lane.b32.xlu0 %v561, 88
      %v808 = vpop.permute.xlu0 %807
      %v810 = vsel %vm565, %v806, 0
      %v813 = vsel %vm565, %v808, 0
      %815 = vmatprep.subr.bf16.mxu0 0
      %816 = vmatpush1.bf16.xpose.msra.mxu0 0
      %817 = vmatprep.subr.bf16.mxu0 0
      %818 = vmatpush1.bf16.xpose.msra.mxu0 0
      %819 = vmatprep.subr.bf16.mxu0 0
      %820 = vmatpush1.bf16.xpose.msra.mxu0 0
      %821 = vmatprep.subr.bf16.mxu0 0
      %822 = vmatpush1.bf16.xpose.msra.mxu0 0
      %823 = vmatprep.subr.bf16.mxu0 0
      %824 = vmatpush1.bf16.xpose.msra.mxu0 0
      %825 = vmatprep.subr.bf16.mxu0 0
      %826 = vmatpush1.bf16.xpose.msra.mxu0 0
      %827 = vmatprep.subr.bf16.mxu0 0
      %828 = vmatpush1.bf16.xpose.msra.mxu0 0
      %829 = vmatprep.subr.bf16.mxu0 0
      %830 = vmatpush1.bf16.xpose.msra.mxu0 %v813
      %831 = vmatprep.subr.bf16.mxu0 0
      %832 = vmatpush2.bf16.xpose.msra.mxu0 0
      %833 = vmatprep.subr.bf16.mxu0 0
      %834 = vmatpush2.bf16.xpose.msra.mxu0 0
      %835 = vmatprep.subr.bf16.mxu0 0
      %836 = vmatpush2.bf16.xpose.msra.mxu0 0
      %837 = vmatprep.subr.bf16.mxu0 0
      %838 = vmatpush2.bf16.xpose.msra.mxu0 0
      %839 = vmatprep.subr.bf16.mxu0 0
      %840 = vmatpush2.bf16.xpose.msra.mxu0 0
      %841 = vmatprep.subr.bf16.mxu0 0
      %842 = vmatpush2.bf16.xpose.msra.mxu0 0
      %843 = vmatprep.subr.bf16.mxu0 0
      %844 = vmatpush2.bf16.xpose.msra.mxu0 0
      %845 = vmatprep.subr.bf16.mxu0 0
      %846 = vmatpush2.bf16.xpose.msra.mxu0 0
      %847 = vmatprep.mubr.bf16.mxu0 0
      %848 = vmatmul.mubr.bf16.gmra.mxu0 %v810
      %v849 = vpop.f32.mrf.mxu0
      %v850 = vadd.f32 0.0, %v849
      %v851 = vpop.f32.mrf.mxu0
      %v852 = vpop.f32.mrf.mxu0
      %v853 = vadd.f32 0.0, %v852
      %v854 = vpop.f32.mrf.mxu0
      %855 = vdwg.mxu0
      %v856 = vsel %vm613, %v850, -inf
      %857 = vmax.xlane.f32.xlu0 %v856
      %v858 = vpop.xlane.xlu0 %857
      %v859 = vsel %vm613, %v853, -inf
      %860 = vmax.xlane.f32.xlu0 %v859
      %v861 = vpop.xlane.xlu0 %860
      %v862 = vsub.f32 %v850, %v858
      %v863 = vsub.f32 %v853, %v861
      %v864 = vmul.f32 %v862, 1.442695
      %v865 = vpow.pop %v864
      %v866 = vmul.f32 %v863, 1.442695
      %v867 = vpow.pop %v866
      %v868 = vsel %vm613, %v865, 0.0
      %869 = vadd.xlane.f32.xlu0 %v868
      %v870 = vpop.xlane.xlu0 %869
      %v871 = vsel %vm613, %v867, 0.0
      %872 = vadd.xlane.f32.xlu0 %v871
      %v873 = vpop.xlane.xlu0 %872
      %v874 = vpack.c.bf16 %v867, %v865
      %875 = vrot.lane.b32.xlu0 %v561, 64
      %v876 = vpop.permute.xlu0 %875
      %v879 = vsel %vm613, %v874, 0
      %881 = vmatprep.subr.bf16.mxu0 0
      %882 = vmatpush1.bf16.msra.mxu0 0
      %883 = vmatprep.subr.bf16.mxu0 0
      %884 = vmatpush1.bf16.msra.mxu0 0
      %885 = vmatprep.subr.bf16.mxu0 0
      %886 = vmatpush1.bf16.msra.mxu0 0
      %887 = vmatprep.subr.bf16.mxu0 0
      %888 = vmatpush1.bf16.msra.mxu0 0
      %889 = vmatprep.subr.bf16.mxu0 0
      %890 = vmatpush1.bf16.msra.mxu0 0
      %891 = vmatprep.subr.bf16.mxu0 0
      %892 = vmatpush1.bf16.msra.mxu0 0
      %893 = vmatprep.subr.bf16.mxu0 0
      %894 = vmatpush1.bf16.msra.mxu0 0
      %895 = vmatprep.subr.bf16.mxu0 0
      %896 = vmatpush1.bf16.msra.mxu0 %v876
      %897 = vmatprep.subr.bf16.mxu0 0
      %898 = vmatpush2.bf16.msra.mxu0 0
      %899 = vmatprep.subr.bf16.mxu0 0
      %900 = vmatpush2.bf16.msra.mxu0 0
      %901 = vmatprep.subr.bf16.mxu0 0
      %902 = vmatpush2.bf16.msra.mxu0 0
      %903 = vmatprep.subr.bf16.mxu0 0
      %904 = vmatpush2.bf16.msra.mxu0 0
      %905 = vmatprep.subr.bf16.mxu0 0
      %906 = vmatpush2.bf16.msra.mxu0 0
      %907 = vmatprep.subr.bf16.mxu0 0
      %908 = vmatpush2.bf16.msra.mxu0 0
      %909 = vmatprep.subr.bf16.mxu0 0
      %910 = vmatpush2.bf16.msra.mxu0 0
      %911 = vmatprep.subr.bf16.mxu0 0
      %912 = vmatpush2.bf16.msra.mxu0 0
      %913 = vmatprep.mubr.bf16.mxu0 0
      %914 = vmatmul.mubr.bf16.gmra.mxu0 %v879
      %v915 = vpop.f32.mrf.mxu0
      %v916 = vadd.f32 0.0, %v915
      %v917 = vpop.f32.mrf.mxu0
      %v918 = vpop.f32.mrf.mxu0
      %v919 = vadd.f32 0.0, %v918
      %v920 = vpop.f32.mrf.mxu0
      %921 = vdwg.mxu0
      %v922 = vrcp.pop %v870
      %v923 = vrcp.pop %v873
      %v924 = vmul.f32 %v916, %v922
      %v925 = vmul.f32 %v919, %v923
      %928 = vrot.lane.b32.xlu0 %v803, 8
      %v929 = vpop.permute.xlu0 %928
      %930 = vrot.lane.b32.xlu0 %v804, 8
      %v931 = vpop.permute.xlu0 %930
      %936 = vrot.lane.b32.xlu0 %v924, 16
      %v937 = vpop.permute.xlu0 %936
      %938 = vrot.lane.b32.xlu0 %v925, 16
      %v939 = vpop.permute.xlu0 %938
      %v942 = vsel %vm565, %v682, %v929
      %v943 = vsel %vm565, %v683, %v931
      %v944 = vsel %vm613, %v942, %v937
      %v945 = vsel %vm613, %v943, %v939
      %v946 = vpack.c.bf16 %v945, %v944
      %v947 = vld [vmem:[%s5] sm:$0xf]
      %v948 = vld [vmem:[%s5 + $0x4] sm:$0xf]
      %v949 = vld [vmem:[%s5 + $0x8] sm:$0xf]
      %v950 = vld [vmem:[%s6] sm:$0x1]
      %v952 = vlaneseq
      %v953 = vshrl.u32 %v952, 7
      %v954 = vsub.s32 0, %v953
      %v955 = vrot.slane %v950, %v954
      %v960 = vunpack.c.l.b16 %v947
      %v961 = vunpack.c.l.b16 %v948
      %v962 = vunpack.c.l.b16 %v949
      %v963 = vpack.c.b16 %v961, %v960
      %v964 = vpack.c.b16 %v962, %v962
      %v967 = vsel %vm447, %v946, 0
      %v970 = vsel %vm516, %v964, 0
      %972 = vmatprep.subr.bf16.mxu0 0
      %973 = vmatpush1.bf16.msra.mxu0 0
      %974 = vmatprep.subr.bf16.mxu0 0
      %975 = vmatpush1.bf16.msra.mxu0 0
      %976 = vmatprep.subr.bf16.mxu0 0
      %977 = vmatpush1.bf16.msra.mxu0 0
      %978 = vmatprep.subr.bf16.mxu0 0
      %979 = vmatpush1.bf16.msra.mxu0 0
      %980 = vmatprep.subr.bf16.mxu0 0
      %981 = vmatpush1.bf16.msra.mxu0 0
      %982 = vmatprep.subr.bf16.mxu0 0
      %983 = vmatpush1.bf16.msra.mxu0 0
      %984 = vmatprep.subr.bf16.mxu0 0
      %985 = vmatpush1.bf16.msra.mxu0 %v970
      %986 = vmatprep.subr.bf16.mxu0 0
      %987 = vmatpush1.bf16.msra.mxu0 %v963
      %988 = vmatprep.subr.bf16.mxu0 0
      %989 = vmatpush2.bf16.msra.mxu0 0
      %990 = vmatprep.subr.bf16.mxu0 0
      %991 = vmatpush2.bf16.msra.mxu0 0
      %992 = vmatprep.subr.bf16.mxu0 0
      %993 = vmatpush2.bf16.msra.mxu0 0
      %994 = vmatprep.subr.bf16.mxu0 0
      %995 = vmatpush2.bf16.msra.mxu0 0
      %996 = vmatprep.subr.bf16.mxu0 0
      %997 = vmatpush2.bf16.msra.mxu0 0
      %998 = vmatprep.subr.bf16.mxu0 0
      %999 = vmatpush2.bf16.msra.mxu0 0
      %1000 = vmatprep.subr.bf16.mxu0 0
      %1001 = vmatpush2.bf16.msra.mxu0 0
      %1002 = vmatprep.subr.bf16.mxu0 0
      %1003 = vmatpush2.bf16.msra.mxu0 0
      %1004 = vmatprep.mubr.bf16.mxu0 0
      %1005 = vmatmul.mubr.bf16.gmra.mxu0 %v967
      %v1006 = vpop.f32.mrf.mxu0
      %v1007 = vadd.f32 %v955, %v1006
      %v1008 = vpop.f32.mrf.mxu0
      %v1009 = vpop.f32.mrf.mxu0
      %v1010 = vadd.f32 %v955, %v1009
      %v1011 = vpop.f32.mrf.mxu0
      %1012 = vdwg.mxu0
      %v1013 = vadd.f32 %v445, %v1007
      %v1014 = vadd.f32 %v446, %v1010
      %v1015 = vsel %vm447, %v1013, 0.0
      %1016 = vadd.xlane.f32.xlu0 %v1015
      %v1017 = vpop.xlane.xlu0 %1016
      %v1018 = vsel %vm447, %v1014, 0.0
      %1019 = vadd.xlane.f32.xlu0 %v1018
      %v1020 = vpop.xlane.xlu0 %1019
      %v1021 = vmul.f32 %v1017, %v454
      %v1022 = vmul.f32 %v1020, %v454
      %v1023 = vsub.f32 %v1013, %v1021
      %v1024 = vsub.f32 %v1014, %v1022
      %v1025 = vmul.f32 %v1023, %v1023
      %v1026 = vmul.f32 %v1024, %v1024
      %v1027 = vsel %vm447, %v1025, 0.0
      %1028 = vadd.xlane.f32.xlu0 %v1027
      %v1029 = vpop.xlane.xlu0 %1028
      %v1030 = vsel %vm447, %v1026, 0.0
      %1031 = vadd.xlane.f32.xlu0 %v1030
      %v1032 = vpop.xlane.xlu0 %1031
      %v1033 = vmul.f32 %v1029, %v454
      %v1034 = vmul.f32 %v1032, %v454
      %v1035 = vadd.f32 %v1033, 1e-05
      %v1036 = vadd.f32 %v1034, 1e-05
      %v1037 = vrsqrt.pop %v1035
      %v1038 = vrsqrt.pop %v1036
      %v1039 = vmul.f32 %v1023, %v1037
      %v1040 = vmul.f32 %v1024, %v1038
      %v1041 = vld [vmem:[%s7] sm:$0x1]
      %v1043 = vlaneseq
      %v1044 = vshrl.u32 %v1043, 7
      %v1045 = vsub.s32 0, %v1044
      %v1046 = vrot.slane %v1041, %v1045
      %v1048 = vmul.f32 %v1039, %v1046
      %v1049 = vmul.f32 %v1040, %v1046
      %v1050 = vld [vmem:[%s8] sm:$0x1]
      %v1052 = vlaneseq
      %v1053 = vshrl.u32 %v1052, 7
      %v1054 = vsub.s32 0, %v1053
      %v1055 = vrot.slane %v1050, %v1054
      %v1057 = vadd.f32 %v1048, %v1055
      %v1058 = vadd.f32 %v1049, %v1055
      %v1059 = vpack.c.bf16 %v1058, %v1057
      %v1060 = vld [vmem:[%s9] sm:$0xf]
      %v1061 = vld [vmem:[%s9 + $0x4] sm:$0xf]
      %v1062 = vld [vmem:[%s9 + $0x8] sm:$0xf]
      %v1063 = vld [vmem:[%s10] sm:$0x1]
      %v1065 = vlaneseq
      %v1066 = vshrl.u32 %v1065, 7
      %v1067 = vsub.s32 0, %v1066
      %v1068 = vrot.slane %v1063, %v1067
      %v1073 = vunpack.c.l.b16 %v1060
      %v1074 = vunpack.c.l.b16 %v1061
      %v1075 = vunpack.c.l.b16 %v1062
      %v1076 = vpack.c.b16 %v1074, %v1073
      %v1077 = vpack.c.b16 %v1075, %v1075
      %v1080 = vsel %vm447, %v1059, 0
      %v1083 = vsel %vm516, %v1077, 0
      %1085 = vmatprep.subr.bf16.mxu0 0
      %1086 = vmatpush1.bf16.msra.mxu0 0
      %1087 = vmatprep.subr.bf16.mxu0 0
      %1088 = vmatpush1.bf16.msra.mxu0 0
      %1089 = vmatprep.subr.bf16.mxu0 0
      %1090 = vmatpush1.bf16.msra.mxu0 0
      %1091 = vmatprep.subr.bf16.mxu0 0
      %1092 = vmatpush1.bf16.msra.mxu0 0
      %1093 = vmatprep.subr.bf16.mxu0 0
      %1094 = vmatpush1.bf16.msra.mxu0 0
      %1095 = vmatprep.subr.bf16.mxu0 0
      %1096 = vmatpush1.bf16.msra.mxu0 0
      %1097 = vmatprep.subr.bf16.mxu0 0
      %1098 = vmatpush1.bf16.msra.mxu0 %v1083
      %1099 = vmatprep.subr.bf16.mxu0 0
      %1100 = vmatpush1.bf16.msra.mxu0 %v1076
      %1101 = vmatprep.subr.bf16.mxu0 0
      %1102 = vmatpush2.bf16.msra.mxu0 0
      %1103 = vmatprep.subr.bf16.mxu0 0
      %1104 = vmatpush2.bf16.msra.mxu0 0
      %1105 = vmatprep.subr.bf16.mxu0 0
      %1106 = vmatpush2.bf16.msra.mxu0 0
      %1107 = vmatprep.subr.bf16.mxu0 0
      %1108 = vmatpush2.bf16.msra.mxu0 0
      %1109 = vmatprep.subr.bf16.mxu0 0
      %1110 = vmatpush2.bf16.msra.mxu0 0
      %1111 = vmatprep.subr.bf16.mxu0 0
      %1112 = vmatpush2.bf16.msra.mxu0 0
      %1113 = vmatprep.subr.bf16.mxu0 0
      %1114 = vmatpush2.bf16.msra.mxu0 0
      %1115 = vmatprep.subr.bf16.mxu0 0
      %1116 = vmatpush2.bf16.msra.mxu0 0
      %1117 = vmatprep.mubr.bf16.mxu0 0
      %1118 = vmatmul.mubr.bf16.gmra.mxu0 %v1080
      %v1119 = vpop.f32.mrf.mxu0
      %v1120 = vadd.f32 %v1068, %v1119
      %v1121 = vpop.f32.mrf.mxu0
      %v1122 = vpop.f32.mrf.mxu0
      %v1123 = vadd.f32 %v1068, %v1122
      %v1124 = vpop.f32.mrf.mxu0
      %1125 = vdwg.mxu0
      %v1126 = vmul.f32 %v1120, %v1120
      %v1127 = vmul.f32 %v1123, %v1123
      %v1128 = vmul.f32 %v1120, %v1126
      %v1129 = vmul.f32 %v1123, %v1127
      %v1130 = vmul.f32 %v1128, 0.044715
      %v1131 = vmul.f32 %v1129, 0.044715
      %v1132 = vadd.f32 %v1120, %v1130
      %v1133 = vadd.f32 %v1123, %v1131
      %v1134 = vmul.f32 %v1132, 0.7978846
      %v1135 = vmul.f32 %v1133, 0.7978846
      %v1136 = vtanh.pop %v1134
      %v1137 = vtanh.pop %v1135
      %v1138 = vadd.f32 %v1136, 1.0
      %v1139 = vadd.f32 %v1137, 1.0
      %v1140 = vmul.f32 %v1138, 0.5
      %v1141 = vmul.f32 %v1139, 0.5
      %v1142 = vmul.f32 %v1120, %v1140
      %v1143 = vmul.f32 %v1123, %v1141
      %v1144 = vpack.c.bf16 %v1143, %v1142
      %v1145 = vld [vmem:[%s11] sm:$0xf]
      %v1146 = vld [vmem:[%s11 + $0x4] sm:$0xf]
      %v1147 = vld [vmem:[%s11 + $0x8] sm:$0xf]
      %v1148 = vld [vmem:[%s11 + $0xc] sm:$0xf]
      %v1149 = vld [vmem:[%s11 + $0x10] sm:$0xf]
      %v1150 = vld [vmem:[%s11 + $0x14] sm:$0xf]
      %v1151 = vld [vmem:[%s11 + $0x18] sm:$0xf]
      %v1152 = vld [vmem:[%s11 + $0x1c] sm:$0xf]
      %v1153 = vld [vmem:[%s11 + $0x20] sm:$0xf]
      %v1154 = vld [vmem:[%s11 + $0x24] sm:$0xf]
      %v1155 = vld [vmem:[%s11 + $0x28] sm:$0xf]
      %v1156 = vld [vmem:[%s11 + $0x2c] sm:$0xf]
      %v1157 = vld [vmem:[%s12] sm:$0x1]
      %v1159 = vlaneseq
      %v1160 = vshrl.u32 %v1159, 7
      %v1161 = vsub.s32 0, %v1160
      %v1162 = vrot.slane %v1157, %v1161
      %v1176 = vunpack.c.l.b16 %v1145
      %v1177 = vunpack.c.l.b16 %v1146
      %v1178 = vunpack.c.l.b16 %v1147
      %v1179 = vunpack.c.l.b16 %v1148
      %v1180 = vunpack.c.l.b16 %v1149
      %v1181 = vunpack.c.l.b16 %v1150
      %v1182 = vunpack.c.l.b16 %v1151
      %v1183 = vunpack.c.l.b16 %v1152
      %v1184 = vunpack.c.l.b16 %v1153
      %v1185 = vunpack.c.l.b16 %v1154
      %v1186 = vunpack.c.l.b16 %v1155
      %v1187 = vunpack.c.l.b16 %v1156
      %v1188 = vpack.c.b16 %v1177, %v1176
      %v1189 = vpack.c.b16 %v1179, %v1178
      %v1190 = vpack.c.b16 %v1181, %v1180
      %v1191 = vpack.c.b16 %v1183, %v1182
      %v1192 = vpack.c.b16 %v1185, %v1184
      %v1193 = vpack.c.b16 %v1187, %v1186
      %vm1200 = vcmask 785408
      %v1202 = vsel %vm1200, %v1144, 0
      %1204 = vmatprep.subr.bf16.mxu0 0
      %1205 = vmatpush1.bf16.msra.mxu0 0
      %1206 = vmatprep.subr.bf16.mxu0 0
      %1207 = vmatpush1.bf16.msra.mxu0 0
      %1208 = vmatprep.subr.bf16.mxu0 0
      %1209 = vmatpush1.bf16.msra.mxu0 %v1193
      %1210 = vmatprep.subr.bf16.mxu0 0
      %1211 = vmatpush1.bf16.msra.mxu0 %v1192
      %1212 = vmatprep.subr.bf16.mxu0 0
      %1213 = vmatpush1.bf16.msra.mxu0 %v1191
      %1214 = vmatprep.subr.bf16.mxu0 0
      %1215 = vmatpush1.bf16.msra.mxu0 %v1190
      %1216 = vmatprep.subr.bf16.mxu0 0
      %1217 = vmatpush1.bf16.msra.mxu0 %v1189
      %1218 = vmatprep.subr.bf16.mxu0 0
      %1219 = vmatpush1.bf16.msra.mxu0 %v1188
      %1220 = vmatprep.subr.bf16.mxu0 0
      %1221 = vmatpush2.bf16.msra.mxu0 0
      %1222 = vmatprep.subr.bf16.mxu0 0
      %1223 = vmatpush2.bf16.msra.mxu0 0
      %1224 = vmatprep.subr.bf16.mxu0 0
      %1225 = vmatpush2.bf16.msra.mxu0 0
      %1226 = vmatprep.subr.bf16.mxu0 0
      %1227 = vmatpush2.bf16.msra.mxu0 0
      %1228 = vmatprep.subr.bf16.mxu0 0
      %1229 = vmatpush2.bf16.msra.mxu0 0
      %1230 = vmatprep.subr.bf16.mxu0 0
      %1231 = vmatpush2.bf16.msra.mxu0 0
      %1232 = vmatprep.subr.bf16.mxu0 0
      %1233 = vmatpush2.bf16.msra.mxu0 0
      %1234 = vmatprep.subr.bf16.mxu0 0
      %1235 = vmatpush2.bf16.msra.mxu0 0
      %1236 = vmatprep.mubr.bf16.mxu0 0
      %1237 = vmatmul.mubr.bf16.gmra.mxu0 %v1202
      %v1238 = vpop.f32.mrf.mxu0
      %v1239 = vadd.f32 %v1162, %v1238
      %v1240 = vpop.f32.mrf.mxu0
      %v1241 = vpop.f32.mrf.mxu0
      %v1242 = vadd.f32 %v1162, %v1241
      %v1243 = vpop.f32.mrf.mxu0
      %1244 = vdwg.mxu0
      %v1245 = vadd.f32 %v1013, %v1239
      %v1246 = vadd.f32 %v1014, %v1242
      %1247 = vst.msk [vmem:[%s442] sm:$0xff] %vm447, %v1245
      %1248 = vst.msk [vmem:[%s442 + $0x8] sm:$0xff] %vm447, %v1246
      %s1249 = smul.u32 2, %s24
      %p1250 = scmp.lt.s32.totalorder %s1249, 3
      %s1251 = scalar_select %p1250, %s1249, 3
      %s1252 = smul.addr %s1251, 8
      %s1253 = scalar_lea.vmem %s13, %s1252
      // Predicated region
      $region73: #{encoder_block_apply.4} parent=71 // pred_check
        %p1254 = pneg %p320
      $region74: #{encoder_block_apply.4} parent=71 // pred_check_branch
        %1256 = sbr.rel (%p1254) target = $region76
      $region75: #{encoder_block_apply.4} parent=71 // pred_region
        %s1257 = smul.u32 2, %s24
      $region76: #{encoder_block_apply.4} parent=71 // pred_fallthru
        _
    $region72: #{encoder_block_apply.4} parent=5 // pred_fallthru
      _
    %p1258 = scmp.le.s32.totalorder 2, %s19
    // Predicated region
    $region77: #{encoder_block_apply.4} parent=5 // pred_check
      %p1259 = pneg %p1258
    $region78: #{encoder_block_apply.4} parent=5 // pred_check_branch
      %1261 = sbr.rel (%p1259) target = $region80
    $region79: #{encoder_block_apply.4} parent=5 // pred_region
      %s1262 = ssub.s32 %s19, 2
      // Predicated region
      $region81: #{encoder_block_apply.4} parent=79 // pred_check
        %p1263 = pneg %p326
      $region82: #{encoder_block_apply.4} parent=79 // pred_check_branch
        %1265 = sbr.rel (%p1263) target = $region84
      $region83: #{encoder_block_apply.4} parent=79 // pred_region
        %s1266 = smul.u32 2, %s25
        %p1267 = scmp.lt.s32.totalorder %s1266, 3
        %s1268 = scalar_select %p1267, %s1266, 3
        %s1269 = smul.addr %s1268, 8
        %s1270 = scalar_lea.vmem %s13, %s1269
      $region84: #{encoder_block_apply.4} parent=79 // pred_fallthru
        _
    $region80: #{encoder_block_apply.4} parent=5 // pred_fallthru
      _
  $region6: #{encoder_block_apply.4} parent=0 // loop_footer
    %s23 = sadd.s32 1, %s19
  $region7: #{encoder_block_apply.4} parent=0 // loop_footer_branch
    %18 = sbr.rel target = $region3
  $region8: #{encoder_block_apply.4} parent=0 // loop_exit
    _

</llo_original>
